<compile_context>
chip_gen: v7x
topology: tpu7x:2x2x1
jax: 0.10.0
libtpu: 0.0.40
codegen_flags: <defaults>
</compile_context>

<pallas_src>
import functools

import jax
import jax.numpy as jnp
from jax.experimental import pallas as pl
from jax.experimental.pallas import tpu as pltpu


# Safe on every generation (v7x: 64 MiB physical per core; v5e/v6e: 128 MiB).
# On v5e/v6e this can be raised toward ~96 MiB to allow larger batch tiles.
_VMEM_LIMIT = 48 * 1024 * 1024


# ----------------------------------------------------------------------------- helpers
def _gelu(x):
    c = 0.7978845608028654  # sqrt(2/pi)
    return 0.5 * x * (1.0 + jnp.tanh(c * (x + 0.044715 * x * x * x)))


def _layernorm(x, g, b, eps=1e-5):
    mu = jnp.mean(x, axis=-1, keepdims=True)
    xc = x - mu
    var = jnp.mean(xc * xc, axis=-1, keepdims=True)
    return xc * jax.lax.rsqrt(var + eps) * g + b


def _round_up(x, m):
    return -(-x // m) * m


def _pick_batch_tile(n, tile):
    tb = max(1, min(tile, n))
    # Keep at least 2 grid steps when N allows so v7x's two TensorCores both get work.
    if n > 1:
        tb = min(tb, _round_up(n, 2) // 2)
    return tb


@functools.lru_cache(maxsize=None)
def _buffered_weights_supported():
    """Probe pipeline_mode=pl.Buffered(1) for constant-index (weight) specs."""
    try:
        def k(x_ref, w_ref, o_ref):
            o_ref[...] = x_ref[...] + w_ref[...]

        out = pl.pallas_call(
            k,
            out_shape=jax.ShapeDtypeStruct((2, 8, 128), jnp.float32),
            grid=(2,),
            in_specs=[pl.BlockSpec((1, 8, 128), lambda i: (i, 0, 0)),
                      pl.BlockSpec((1, 8, 128), lambda i: (0, 0, 0),
                                   pipeline_mode=pl.Buffered(1))],
            out_specs=pl.BlockSpec((1, 8, 128), lambda i: (i, 0, 0)),
        )(jnp.zeros((2, 8, 128), jnp.float32), jnp.ones((1, 8, 128), jnp.float32))
        out = jax.block_until_ready(out)
        return bool(jnp.all(out == 1.0))
    except Exception:
        return False


def _const_spec(shape):
    """Constant-index weight BlockSpec; single-buffered when supported (halves VMEM)."""
    idx = lambda b, n=len(shape): (0,) * n
    if _buffered_weights_supported():
        return pl.BlockSpec(shape, idx, pipeline_mode=pl.Buffered(1))
    return pl.BlockSpec(shape, idx)


# ----------------------------------------------------------------------------- kernels
def transformer_layer_kernel(x_ref, g1_ref, b1_ref, wq_ref, bq_ref, wkv_ref, bkv_ref,
                             wo_ref, bo_ref, g2_ref, b2_ref, w1_ref, fb1_ref,
                             w2_ref, fb2_ref, o_ref, *, num_heads, out_rows):
    """Pre-norm TransformerEncoderLayer on a (TB, S, E) batch tile.

    If out_rows is not None, only the first `out_rows` query rows are computed
    (K/V still cover all tokens) — used for the last layer where only the pooled
    tokens are consumed.  MXU operands are bf16, accumulation and all pointwise
    math (LN / softmax / GELU / residuals) are f32.
    """
    x = x_ref[...]                                       # (TB, S, E) f32
    TB, S, E = x.shape
    H = num_heads
    Dh = E // H
    R = S if out_rows is None else out_rows
    scale = Dh ** -0.5

    # ---- pre-norm 1 (all rows: K/V attend over every token) ----
    h = _layernorm(x, g1_ref[...], b1_ref[...])          # f32
    hf = h.reshape(TB * S, E).astype(jnp.bfloat16)

    # fused K/V projection (one (E, 2E) MXU pass); Q only for the rows we keep
    kv = jnp.dot(hf, wkv_ref[...], preferred_element_type=jnp.float32) + bkv_ref[...]
    k16 = kv[:, :E].reshape(TB, S, E).astype(jnp.bfloat16)
    v16 = kv[:, E:].reshape(TB, S, E).astype(jnp.bfloat16)

    hq = hf if R == S else h[:, :R, :].reshape(TB * R, E).astype(jnp.bfloat16)
    q = (jnp.dot(hq, wq_ref[...], preferred_element_type=jnp.float32)
         + bq_ref[...]).reshape(TB, R, E) * scale
    q16 = q.astype(jnp.bfloat16)

    # ---- multi-head attention ----
    # Per-head scores/softmax/ctx (contraction is Dh regardless of batching), then the
    # heads are concatenated back onto the lane axis and the output projection runs as a
    # single K=E matmul (instead of H tiny K=Dh dots + H accumulations).
    ctx_heads = []
    for hh in range(H):
        lo, hi = hh * Dh, (hh + 1) * Dh
        s = jnp.einsum('bqd,bkd->bqk', q16[:, :, lo:hi], k16[:, :, lo:hi],
                       preferred_element_type=jnp.float32)            # (TB, R, S) f32
        s = s - jnp.max(s, axis=-1, keepdims=True)
        ex = jnp.exp(s)
        p = ex * pl.reciprocal(jnp.sum(ex, axis=-1, keepdims=True), approx=True)
        ctx_heads.append(jnp.einsum('bqk,bkd->bqd', p.astype(jnp.bfloat16),
                                    v16[:, :, lo:hi],
                                    preferred_element_type=jnp.float32))
    ctx = jnp.concatenate(ctx_heads, axis=-1).reshape(TB * R, E)       # f32
    attn = (jnp.dot(ctx.astype(jnp.bfloat16), wo_ref[...],
                    preferred_element_type=jnp.float32) + bo_ref[...])

    xr = x[:, :R, :] + attn.reshape(TB, R, E)            # residual (kept rows only)

    # ---- pre-norm 2 + GELU FFN (kept rows only) ----
    h2 = _layernorm(xr, g2_ref[...], b2_ref[...]).reshape(TB * R, E)
    f = jnp.dot(h2.astype(jnp.bfloat16), w1_ref[...],
                preferred_element_type=jnp.float32) + fb1_ref[...]
    f = _gelu(f)
    f = jnp.dot(f.astype(jnp.bfloat16), w2_ref[...],
                preferred_element_type=jnp.float32) + fb2_ref[...]

    o_ref[...] = xr + f.reshape(TB, R, E)


def mlp_head_kernel(x_ref, w1_ref, b1_ref, w2_ref, b2_ref, o_ref):
    """Linear -> GELU -> Linear projection head (bf16 MXU operands, f32 accumulate)."""
    h = (jnp.dot(x_ref[...].astype(jnp.bfloat16), w1_ref[...],
                 preferred_element_type=jnp.float32) + b1_ref[...])
    h = _gelu(h)
    o_ref[...] = (jnp.dot(h.astype(jnp.bfloat16), w2_ref[...],
                          preferred_element_type=jnp.float32) + b2_ref[...])


def clip_loss_kernel(mol_ref, txt_ref, scale_ref, o_ref):
    """L2-normalize, scaled logits, symmetric cross-entropy (labels = arange)."""
    m = mol_ref[...]                                     # (N, E) f32
    t = txt_ref[...]
    n = m.shape[0]
    sc = scale_ref[...]                                  # (1, 1)
    mn = m * jax.lax.rsqrt(jnp.sum(m * m, axis=-1, keepdims=True))
    tn = t * jax.lax.rsqrt(jnp.sum(t * t, axis=-1, keepdims=True))
    logits = jax.lax.dot_general(mn, tn, (((1,), (1,)), ((), ())),
                                 preferred_element_type=jnp.float32) * sc

    # Diagonal (labels == arange) directly as a row-wise dot: no NxN iota/mask work.
    diag = jnp.sum(mn * tn, axis=-1, keepdims=True) * sc                 # (n, 1)

    rmax = jnp.max(logits, axis=1, keepdims=True)
    lse_r = jnp.log(jnp.sum(jnp.exp(logits - rmax), axis=1, keepdims=True)) + rmax  # (n,1)
    cmax = jnp.max(logits, axis=0, keepdims=True)
    lse_c = jnp.log(jnp.sum(jnp.exp(logits - cmax), axis=0, keepdims=True)) + cmax  # (1,n)

    sum_r = jnp.sum(lse_r, axis=0, keepdims=True)        # (1,1)
    sum_c = jnp.sum(lse_c, axis=1, keepdims=True)        # (1,1)
    sum_d = jnp.sum(diag, axis=0, keepdims=True)         # (1,1)
    # (mean(lse_r - diag) + mean(lse_c - diag)) / 2
    o_ref[...] = ((sum_r + sum_c) * 0.5 - sum_d) / n


# ----------------------------------------------------------------------------- params
def _prepare_layer(p):
    """torch-layout layer params -> kernel layout (pre-transposed, bf16 weights)."""
    E = p["out_proj_w"].shape[0]
    bf = jnp.bfloat16
    return dict(
        g1=p["ln1_g"][None], b1=p["ln1_b"][None],
        wq=p["in_proj_w"][:E].T.astype(bf), bq=p["in_proj_b"][:E][None],
        wkv=p["in_proj_w"][E:].T.astype(bf), bkv=p["in_proj_b"][E:][None],
        wo=p["out_proj_w"].T.astype(bf), bo=p["out_proj_b"][None],
        g2=p["ln2_g"][None], b2=p["ln2_b"][None],
        w1=p["ffn_w1"].T.astype(bf), fb1=p["ffn_b1"][None],
        w2=p["ffn_w2"].T.astype(bf), fb2=p["ffn_b2"][None],
    )


def _prepare_mlp(w1, b1, w2, b2):
    bf = jnp.bfloat16
    return dict(w1=w1.T.astype(bf), b1=b1[None], w2=w2.T.astype(bf), b2=b2[None])


def prepare_params(params):
    """One-time conversion of torch-layout params to kernel-ready tensors."""
    return dict(
        mol_pos=params["mol_pos"], txt_pos=params["txt_pos"],
        tex_pad_token=params["tex_pad_token"],
        mol_heads=params["mol_heads"], txt_heads=params["txt_heads"],
        logit_scale=params["logit_scale"],
        mol_layers=[_prepare_layer(p) for p in params["mol_layers"]],
        txt_layers=[_prepare_layer(p) for p in params["txt_layers"]],
        mol_proj=_prepare_mlp(params["mol_proj_w1"], params["mol_proj_b1"],
                              params["mol_proj_w2"], params["mol_proj_b2"]),
        text_proj=_prepare_mlp(params["text_proj_w1"], params["text_proj_b1"],
                               params["text_proj_w2"], params["text_proj_b2"]),
    )


# ----------------------------------------------------------------------------- wrappers
def transformer_layer(x, lp, *, num_heads, out_rows=None, batch_tile=8):
    """x: (N, S, E) float32 batch-first; lp: prepared layer params."""
    N, S, E = x.shape
    F = lp["w1"].shape[1]
    R = S if out_rows is None else out_rows
    if out_rows is not None:
        # Last-layer mode keeps only R rows; use a much larger batch tile so the
        # Q / attention / out-proj / FFN matmuls still see >=128 rows per step.
        batch_tile = max(batch_tile, 128 // max(R, 1))

    TB = _pick_batch_tile(N, batch_tile)
    Np = _round_up(N, TB)
    if Np != N:                                          # pad batch, don't shrink tile
        x = jnp.concatenate([x, jnp.zeros((Np - N, S, E), x.dtype)], axis=0)
    grid = (Np // TB,)

    kernel = functools.partial(transformer_layer_kernel,
                               num_heads=num_heads, out_rows=out_rows)
    out = pl.pallas_call(
        kernel,
        out_shape=jax.ShapeDtypeStruct((Np, R, E), jnp.float32),
        grid=grid,
        in_specs=[
            pl.BlockSpec((TB, S, E), lambda b: (b, 0, 0)),             # x (batch tile)
            _const_spec((1, E)), _const_spec((1, E)),                  # ln1
            _const_spec((E, E)), _const_spec((1, E)),                  # Wq, bq
            _const_spec((E, 2 * E)), _const_spec((1, 2 * E)),          # Wkv, bkv
            _const_spec((E, E)), _const_spec((1, E)),                  # Wo, bo
            _const_spec((1, E)), _const_spec((1, E)),                  # ln2
            _const_spec((E, F)), _const_spec((1, F)),                  # W1, b1
            _const_spec((F, E)), _const_spec((1, E)),                  # W2, b2
        ],
        out_specs=pl.BlockSpec((TB, R, E), lambda b: (b, 0, 0)),
        compiler_params=pltpu.CompilerParams(
            dimension_semantics=("parallel",),
            vmem_limit_bytes=_VMEM_LIMIT),
    )(x, lp["g1"], lp["b1"], lp["wq"], lp["bq"], lp["wkv"], lp["bkv"],
      lp["wo"], lp["bo"], lp["g2"], lp["b2"], lp["w1"], lp["fb1"],
      lp["w2"], lp["fb2"])
    return out[:N]


def mlp_head(x, mp, *, row_tile=128):
    """x: (N, Din) f32; mp: prepared head params (w1 (Din,Dhid), w2 (Dhid,Dout) bf16)."""
    N, Din = x.shape
    Dhid = mp["w1"].shape[1]
    Dout = mp["w2"].shape[1]
    Np = _round_up(N, 8)
    TB = min(row_tile, Np)
    Np = _round_up(Np, TB)
    if Np != N:
        x = jnp.concatenate([x, jnp.zeros((Np - N, Din), x.dtype)], axis=0)
    out = pl.pallas_call(
        mlp_head_kernel,
        out_shape=jax.ShapeDtypeStruct((Np, Dout), jnp.float32),
        grid=(Np // TB,),
        in_specs=[
            pl.BlockSpec((TB, Din), lambda i: (i, 0)),
            _const_spec((Din, Dhid)), _const_spec((1, Dhid)),
            _const_spec((Dhid, Dout)), _const_spec((1, Dout)),
        ],
        out_specs=pl.BlockSpec((TB, Dout), lambda i: (i, 0)),
        compiler_params=pltpu.CompilerParams(
            dimension_semantics=("parallel",),
            vmem_limit_bytes=_VMEM_LIMIT),
    )(x, mp["w1"], mp["b1"], mp["w2"], mp["b2"])
    return out[:N]


def clip_loss(mol_feat, text_feat, logit_scale):
    N, E = mol_feat.shape
    scale = jnp.exp(logit_scale).reshape(1, 1).astype(jnp.float32)
    out = pl.pallas_call(
        clip_loss_kernel,
        out_shape=jax.ShapeDtypeStruct((1, 1), jnp.float32),
        grid=(1,),
        in_specs=[
            pl.BlockSpec((N, E), lambda i: (0, 0)),
            pl.BlockSpec((N, E), lambda i: (0, 0)),
            pl.BlockSpec((1, 1), lambda i: (0, 0)),
        ],
        out_specs=pl.BlockSpec((1, 1), lambda i: (0, 0)),
        compiler_params=pltpu.CompilerParams(dimension_semantics=("arbitrary",)),
    )(mol_feat, text_feat, scale)
    return out[0, 0]


def mmpl_forward(inputs, p):
    """Forward of MMPL_Pretrain_Model downstream of the external encoders.

    `p` is the output of prepare_params (weights pre-transposed / pre-cast once).
    """
    # ---------------- mol branch (Mol_Encoder after kpgt.get_feats) ----------------
    mol = jnp.concatenate([inputs["fp"], inputs["md"], inputs["readout"]], axis=1)
    mol = mol + p["mol_pos"][None]
    mol = transformer_layer(mol, p["mol_layers"][0], num_heads=p["mol_heads"])
    mol = transformer_layer(mol, p["mol_layers"][1], num_heads=p["mol_heads"],
                            out_rows=2)                   # only tokens 0,1 are used
    mol_tok = mol.reshape(mol.shape[0], -1)               # concat(token0, token1) (N, 2E)
    mol_feat = mlp_head(mol_tok, p["mol_proj"])

    # ---------------- text branch (after SciBERT last_hidden_state) ----------------
    toks = inputs["text_tokens"]                          # (N, T, E)
    N, T, E = toks.shape
    S = p["txt_pos"].shape[0]
    if T > S:
        toks = toks[:, :S, :]
    elif T < S:
        pad = jnp.broadcast_to(p["tex_pad_token"][None, None, :], (N, S - T, E))
        toks = jnp.concatenate([toks, pad], axis=1)
    txt = toks + p["txt_pos"][None]
    txt = transformer_layer(txt, p["txt_layers"][0], num_heads=p["txt_heads"])
    txt = transformer_layer(txt, p["txt_layers"][1], num_heads=p["txt_heads"],
                            out_rows=1)                   # only token 0 is used
    txt_feat = mlp_head(txt[:, 0, :], p["text_proj"])

    # ---------------- contrastive loss ----------------
    loss = clip_loss(mol_feat, txt_feat, p["logit_scale"])
    return loss, mol_feat, txt_feat


# ----------------------------------------------------------------------------- reference
def _layer_ref(x, p, H):
    N, S, E = x.shape
    Dh = E // H
    h = _layernorm(x, p["ln1_g"], p["ln1_b"])
    qkv = h @ p["in_proj_w"].T + p["in_proj_b"]
    q, k, v = qkv[..., :E], qkv[..., E:2 * E], qkv[..., 2 * E:]
    split = lambda t: t.reshape(N, S, H, Dh).transpose(0, 2, 1, 3)
    q, k, v = split(q) * Dh ** -0.5, split(k), split(v)
    a = jax.nn.softmax(q @ jnp.swapaxes(k, -1, -2), axis=-1)
    ctx = (a @ v).transpose(0, 2, 1, 3).reshape(N, S, E)
    x = x + ctx @ p["out_proj_w"].T + p["out_proj_b"]
    h2 = _layernorm(x, p["ln2_g"], p["ln2_b"])
    f = _gelu(h2 @ p["ffn_w1"].T + p["ffn_b1"]) @ p["ffn_w2"].T + p["ffn_b2"]
    return x + f


def mmpl_forward_ref(inputs, params):
    mol = jnp.concatenate([inputs["fp"], inputs["md"], inputs["readout"]], axis=1)
    mol = mol + params["mol_pos"][None]
    for p in params["mol_layers"]:
        mol = _layer_ref(mol, p, params["mol_heads"])
    mol_tok = jnp.concatenate([mol[:, 0, :], mol[:, 1, :]], axis=-1)
    mol_feat = (_gelu(mol_tok @ params["mol_proj_w1"].T + params["mol_proj_b1"])
                @ params["mol_proj_w2"].T + params["mol_proj_b2"])

    toks = inputs["text_tokens"]
    N, T, E = toks.shape
    S = params["txt_pos"].shape[0]
    if T > S:
        toks = toks[:, :S, :]
    elif T < S:
        pad = jnp.broadcast_to(params["tex_pad_token"][None, None, :], (N, S - T, E))
        toks = jnp.concatenate([toks, pad], axis=1)
    txt = toks + params["txt_pos"][None]
    for p in params["txt_layers"]:
        txt = _layer_ref(txt, p, params["txt_heads"])
    txt_feat = (_gelu(txt[:, 0, :] @ params["text_proj_w1"].T + params["text_proj_b1"])
                @ params["text_proj_w2"].T + params["text_proj_b2"])

    mn = mol_feat / jnp.sqrt(jnp.sum(mol_feat ** 2, axis=1, keepdims=True))
    tn = txt_feat / jnp.sqrt(jnp.sum(txt_feat ** 2, axis=1, keepdims=True))
    logits = jnp.exp(params["logit_scale"]) * mn @ tn.T
    loss_m = jnp.mean(jax.nn.logsumexp(logits, axis=1) - jnp.diag(logits))
    loss_t = jnp.mean(jax.nn.logsumexp(logits, axis=0) - jnp.diag(logits))
    return (loss_m + loss_t) / 2.0, mol_feat, txt_feat


# ----------------------------------------------------------------------------- main
def _init_layer(key, E, F):
    ks = jax.random.split(key, 10)
    s = 0.1
    return dict(
        ln1_g=1.0 + 0.1 * jax.random.normal(ks[8], (E,), jnp.float32),
        ln1_b=0.1 * jax.random.normal(ks[9], (E,), jnp.float32),
        in_proj_w=jax.random.normal(ks[0], (3 * E, E), jnp.float32) * s,
        in_proj_b=jax.random.normal(ks[1], (3 * E,), jnp.float32) * s,
        out_proj_w=jax.random.normal(ks[2], (E, E), jnp.float32) * s,
        out_proj_b=jax.random.normal(ks[3], (E,), jnp.float32) * s,
        ln2_g=jnp.ones((E,), jnp.float32),
        ln2_b=jnp.zeros((E,), jnp.float32),
        ffn_w1=jax.random.normal(ks[4], (F, E), jnp.float32) * s,
        ffn_b1=jax.random.normal(ks[5], (F,), jnp.float32) * s,
        ffn_w2=jax.random.normal(ks[6], (E, F), jnp.float32) * s,
        ffn_b2=jax.random.normal(ks[7], (E,), jnp.float32) * s,
    )


if __name__ == "__main__":
    # scaled-down shapes: batch=2, embed=32, heads=4, ffn=64,
    # mol seq=8 (orig 32), text seq=16 (orig 77), raw text tokens=12 (pad branch)
    N, E, F = 2, 32, 64
    H_MOL, H_TXT = 4, 4
    S_MOL, S_TXT, T_RAW = 8, 16, 12

    key = jax.random.PRNGKey(0)
    k = iter(jax.random.split(key, 32))

    inputs = dict(
        fp=jax.random.normal(next(k), (N, 1, E), jnp.float32),
        md=jax.random.normal(next(k), (N, 1, E), jnp.float32),
        readout=jax.random.normal(next(k), (N, S_MOL - 2, E), jnp.float32),
        text_tokens=jax.random.normal(next(k), (N, T_RAW, E), jnp.float32),
    )
    params = dict(
        mol_pos=jax.random.normal(next(k), (S_MOL, E), jnp.float32) * 0.02,
        txt_pos=jax.random.normal(next(k), (S_TXT, E), jnp.float32) * 0.02,
        tex_pad_token=jax.random.normal(next(k), (E,), jnp.float32) * 0.02,
        mol_layers=[_init_layer(next(k), E, F), _init_layer(next(k), E, F)],
        txt_layers=[_init_layer(next(k), E, F), _init_layer(next(k), E, F)],
        mol_heads=H_MOL, txt_heads=H_TXT,
        mol_proj_w1=jax.random.normal(next(k), (E, 2 * E), jnp.float32) * 0.1,
        mol_proj_b1=jax.random.normal(next(k), (E,), jnp.float32) * 0.1,
        mol_proj_w2=jax.random.normal(next(k), (E, E), jnp.float32) * 0.1,
        mol_proj_b2=jax.random.normal(next(k), (E,), jnp.float32) * 0.1,
        text_proj_w1=jax.random.normal(next(k), (E, E), jnp.float32) * 0.1,
        text_proj_b1=jax.random.normal(next(k), (E,), jnp.float32) * 0.1,
        text_proj_w2=jax.random.normal(next(k), (E, E), jnp.float32) * 0.1,
        text_proj_b2=jax.random.normal(next(k), (E,), jnp.float32) * 0.1,
        logit_scale=jnp.asarray(jnp.log(1.0 / 0.07), jnp.float32),
    )

    prepared = prepare_params(params)          # one-time weight transpose/slice/bf16 cast
    loss, mol_feat, txt_feat = mmpl_forward(inputs, prepared)
    loss = jax.block_until_ready(loss)
    assert mol_feat.shape == (N, E) and txt_feat.shape == (N, E)

    # Tolerances are loosened vs the pure-f32 reference because the kernels use bf16
    # MXU operands (f32 accumulation) and the EUP approximate reciprocal in softmax.
    ref_loss, ref_mol, ref_txt = mmpl_forward_ref(inputs, params)
    assert jnp.allclose(mol_feat, ref_mol, rtol=5e-2, atol=5e-2), (
        f"mol max err {jnp.max(jnp.abs(mol_feat - ref_mol))}")
    assert jnp.allclose(txt_feat, ref_txt, rtol=5e-2, atol=5e-2), (
        f"text max err {jnp.max(jnp.abs(txt_feat - ref_txt))}")
    assert jnp.allclose(loss, ref_loss, rtol=1e-1, atol=2e-1), (
        f"loss {loss} vs {ref_loss}")

    print("KERNEL_OK")
</pallas_src>

<mosaic_0001>
module attributes {stable_mosaic.version = 11 : i64} {
  func.func @k(%arg0: i32, %arg1: memref<1x8x128xf32, #tpu.memory_space<vmem>>, %arg2: memref<1x8x128xf32, #tpu.memory_space<vmem>>, %arg3: memref<1x8x128xf32, #tpu.memory_space<vmem>>) attributes {dimension_semantics = [#tpu.dimension_semantics<arbitrary>], iteration_bounds = array<i64: 2>, scalar_prefetch = 0 : i64, scratch_operands = 0 : i64, tpu.core_type = #tpu.core_type<tc>, window_params = [{transform_indices = @transform_0, window_bounds = array<i64: 1, 8, 128>}, {pipeline_mode = #tpu.pipeline_mode<synchronous>, transform_indices = @transform_1, window_bounds = array<i64: 1, 8, 128>}, {transform_indices = @transform_2, window_bounds = array<i64: 1, 8, 128>}]} {
    %c0 = arith.constant 0 : index
    %c0_0 = arith.constant 0 : index
    %c0_1 = arith.constant 0 : index
    %0 = vector.load %arg1[%c0, %c0_0, %c0_1] : memref<1x8x128xf32, #tpu.memory_space<vmem>>, vector<1x8x128xf32>
    %c0_2 = arith.constant 0 : index
    %c0_3 = arith.constant 0 : index
    %c0_4 = arith.constant 0 : index
    %1 = vector.load %arg2[%c0_2, %c0_3, %c0_4] : memref<1x8x128xf32, #tpu.memory_space<vmem>>, vector<1x8x128xf32>
    %2 = arith.addf %0, %1 : vector<1x8x128xf32>
    %c0_5 = arith.constant 0 : index
    %c0_6 = arith.constant 0 : index
    %c0_7 = arith.constant 0 : index
    %3 = vector.load %arg3[%c0_5, %c0_6, %c0_7] : memref<1x8x128xf32, #tpu.memory_space<vmem>>, vector<1x8x128xf32>
    tpu.vector_store %arg3[%c0_5, %c0_6, %c0_7], %2 {strides = array<i32>} : memref<1x8x128xf32, #tpu.memory_space<vmem>>, vector<1x8x128xf32>,
    return
  }
  func.func @transform_0(%arg0: i32) -> (i32, i32, i32) {
    %c0_i32 = arith.constant 0 : i32
    %c0_i32_0 = arith.constant 0 : i32
    %c0_i32_1 = arith.constant 0 : i32
    return %arg0, %c0_i32, %c0_i32_0 : i32, i32, i32
  }
  func.func @transform_1(%arg0: i32) -> (i32, i32, i32) {
    %c0_i32 = arith.constant 0 : i32
    %c0_i32_0 = arith.constant 0 : i32
    %c0_i32_1 = arith.constant 0 : i32
    %c0_i32_2 = arith.constant 0 : i32
    return %c0_i32, %c0_i32_0, %c0_i32_1 : i32, i32, i32
  }
  func.func @transform_2(%arg0: i32) -> (i32, i32, i32) {
    %c0_i32 = arith.constant 0 : i32
    %c0_i32_0 = arith.constant 0 : i32
    %c0_i32_1 = arith.constant 0 : i32
    return %arg0, %c0_i32, %c0_i32_0 : i32, i32, i32
  }
}

module attributes {stable_mosaic.version = 11 : i64} {
  func.func @transformer_layer_kernel(%arg0: i32, %arg1: memref<1x8x32xf32, #tpu.memory_space<vmem>>, %arg2: memref<1x32xf32, #tpu.memory_space<vmem>>, %arg3: memref<1x32xf32, #tpu.memory_space<vmem>>, %arg4: memref<32x32xbf16, #tpu.memory_space<vmem>>, %arg5: memref<1x32xf32, #tpu.memory_space<vmem>>, %arg6: memref<32x64xbf16, #tpu.memory_space<vmem>>, %arg7: memref<1x64xf32, #tpu.memory_space<vmem>>, %arg8: memref<32x32xbf16, #tpu.memory_space<vmem>>, %arg9: memref<1x32xf32, #tpu.memory_space<vmem>>, %arg10: memref<1x32xf32, #tpu.memory_space<vmem>>, %arg11: memref<1x32xf32, #tpu.memory_space<vmem>>, %arg12: memref<32x64xbf16, #tpu.memory_space<vmem>>, %arg13: memref<1x64xf32, #tpu.memory_space<vmem>>, %arg14: memref<64x32xbf16, #tpu.memory_space<vmem>>, %arg15: memref<1x32xf32, #tpu.memory_space<vmem>>, %arg16: memref<1x8x32xf32, #tpu.memory_space<vmem>>) attributes {dimension_semantics = [#tpu.dimension_semantics<parallel>], iteration_bounds = array<i64: 2>, scalar_prefetch = 0 : i64, scratch_operands = 0 : i64, tpu.core_type = #tpu.core_type<tc>, window_params = [{transform_indices = @transform_0, window_bounds = array<i64: 1, 8, 32>}, {pipeline_mode = #tpu.pipeline_mode<synchronous>, transform_indices = @transform_1, window_bounds = array<i64: 1, 32>}, {pipeline_mode = #tpu.pipeline_mode<synchronous>, transform_indices = @transform_2, window_bounds = array<i64: 1, 32>}, {pipeline_mode = #tpu.pipeline_mode<synchronous>, transform_indices = @transform_3, window_bounds = array<i64: 32, 32>}, {pipeline_mode = #tpu.pipeline_mode<synchronous>, transform_indices = @transform_4, window_bounds = array<i64: 1, 32>}, {pipeline_mode = #tpu.pipeline_mode<synchronous>, transform_indices = @transform_5, window_bounds = array<i64: 32, 64>}, {pipeline_mode = #tpu.pipeline_mode<synchronous>, transform_indices = @transform_6, window_bounds = array<i64: 1, 64>}, {pipeline_mode = #tpu.pipeline_mode<synchronous>, transform_indices = @transform_7, window_bounds = array<i64: 32, 32>}, {pipeline_mode = #tpu.pipeline_mode<synchronous>, transform_indices = @transform_8, window_bounds = array<i64: 1, 32>}, {pipeline_mode = #tpu.pipeline_mode<synchronous>, transform_indices = @transform_9, window_bounds = array<i64: 1, 32>}, {pipeline_mode = #tpu.pipeline_mode<synchronous>, transform_indices = @transform_10, window_bounds = array<i64: 1, 32>}, {pipeline_mode = #tpu.pipeline_mode<synchronous>, transform_indices = @transform_11, window_bounds = array<i64: 32, 64>}, {pipeline_mode = #tpu.pipeline_mode<synchronous>, transform_indices = @transform_12, window_bounds = array<i64: 1, 64>}, {pipeline_mode = #tpu.pipeline_mode<synchronous>, transform_indices = @transform_13, window_bounds = array<i64: 64, 32>}, {pipeline_mode = #tpu.pipeline_mode<synchronous>, transform_indices = @transform_14, window_bounds = array<i64: 1, 32>}, {transform_indices = @transform_15, window_bounds = array<i64: 1, 8, 32>}]} {
    %c0 = arith.constant 0 : index
    %c0_0 = arith.constant 0 : index
    %c0_1 = arith.constant 0 : index
    %0 = vector.load %arg1[%c0, %c0_0, %c0_1] : memref<1x8x32xf32, #tpu.memory_space<vmem>>, vector<1x8x32xf32>
    %c0_2 = arith.constant 0 : index
    %c0_3 = arith.constant 0 : index
    %1 = vector.load %arg2[%c0_2, %c0_3] : memref<1x32xf32, #tpu.memory_space<vmem>>, vector<1x32xf32>
    %c0_4 = arith.constant 0 : index
    %c0_5 = arith.constant 0 : index
    %2 = vector.load %arg3[%c0_4, %c0_5] : memref<1x32xf32, #tpu.memory_space<vmem>>, vector<1x32xf32>
    %cst = arith.constant dense<0.000000e+00> : vector<1x8xf32>
    %3 = vector.multi_reduction <add>, %0, %cst [2] : vector<1x8x32xf32> to vector<1x8xf32>
    %4 = vector.shape_cast %3 : vector<1x8xf32> to vector<1x8x1xf32>
    %cst_6 = arith.constant 3.200000e+01 : f32
    %5 = vector.broadcast %cst_6 : f32 to vector<1x8x1xf32>
    %6 = arith.divf %4, %5 : vector<1x8x1xf32>
    %7 = vector.broadcast %6 : vector<1x8x1xf32> to vector<1x8x32xf32>
    %8 = arith.subf %0, %7 : vector<1x8x32xf32>
    %9 = arith.mulf %8, %8 : vector<1x8x32xf32>
    %cst_7 = arith.constant dense<0.000000e+00> : vector<1x8xf32>
    %10 = vector.multi_reduction <add>, %9, %cst_7 [2] : vector<1x8x32xf32> to vector<1x8xf32>
    %11 = vector.shape_cast %10 : vector<1x8xf32> to vector<1x8x1xf32>
    %cst_8 = arith.constant 3.200000e+01 : f32
    %12 = vector.broadcast %cst_8 : f32 to vector<1x8x1xf32>
    %13 = arith.divf %11, %12 : vector<1x8x1xf32>
    %cst_9 = arith.constant 9.99999974E-6 : f32
    %14 = vector.broadcast %cst_9 : f32 to vector<1x8x1xf32>
    %15 = arith.addf %13, %14 : vector<1x8x1xf32>
    %16 = math.rsqrt %15 : vector<1x8x1xf32>
    %17 = vector.broadcast %16 : vector<1x8x1xf32> to vector<1x8x32xf32>
    %18 = arith.mulf %8, %17 : vector<1x8x32xf32>
    %19 = vector.shape_cast %1 : vector<1x32xf32> to vector<1x1x32xf32>
    %20 = vector.broadcast %19 : vector<1x1x32xf32> to vector<1x8x32xf32>
    %21 = arith.mulf %18, %20 : vector<1x8x32xf32>
    %22 = vector.shape_cast %2 : vector<1x32xf32> to vector<1x1x32xf32>
    %23 = vector.broadcast %22 : vector<1x1x32xf32> to vector<1x8x32xf32>
    %24 = arith.addf %21, %23 : vector<1x8x32xf32>
    %25 = vector.shape_cast %24 : vector<1x8x32xf32> to vector<8x32xf32>
    %26 = arith.truncf %25 : vector<8x32xf32> to vector<8x32xbf16>
    %c0_10 = arith.constant 0 : index
    %c0_11 = arith.constant 0 : index
    %27 = vector.load %arg6[%c0_10, %c0_11] : memref<32x64xbf16, #tpu.memory_space<vmem>>, vector<32x64xbf16>
    %cst_12 = arith.constant dense<0.000000e+00> : vector<8x64xf32>
    %28 = tpu.matmul %26, %27, %cst_12 {dimension_numbers = #tpu.dot_dimension_numbers<[1], [0], [0], [1], [0, 0, 1, 1], [], []>} : vector<8x32xbf16>, vector<32x64xbf16>, vector<8x64xf32> -> vector<8x64xf32>
    %c0_13 = arith.constant 0 : index
    %c0_14 = arith.constant 0 : index
    %29 = vector.load %arg7[%c0_13, %c0_14] : memref<1x64xf32, #tpu.memory_space<vmem>>, vector<1x64xf32>
    %30 = vector.broadcast %29 : vector<1x64xf32> to vector<8x64xf32>
    %31 = arith.addf %28, %30 : vector<8x64xf32>
    %32 = vector.extract_strided_slice %31 {offsets = [0, 0], sizes = [8, 32], strides = [1, 1]} : vector<8x64xf32> to vector<8x32xf32>
    %33 = vector.shape_cast %32 : vector<8x32xf32> to vector<1x8x32xf32>
    %34 = arith.truncf %33 : vector<1x8x32xf32> to vector<1x8x32xbf16>
    %35 = vector.extract_strided_slice %31 {offsets = [0, 32], sizes = [8, 32], strides = [1, 1]} : vector<8x64xf32> to vector<8x32xf32>
    %36 = vector.shape_cast %35 : vector<8x32xf32> to vector<1x8x32xf32>
    %37 = arith.truncf %36 : vector<1x8x32xf32> to vector<1x8x32xbf16>
    %c0_15 = arith.constant 0 : index
    %c0_16 = arith.constant 0 : index
    %38 = vector.load %arg4[%c0_15, %c0_16] : memref<32x32xbf16, #tpu.memory_space<vmem>>, vector<32x32xbf16>
    %cst_17 = arith.constant dense<0.000000e+00> : vector<8x32xf32>
    %39 = tpu.matmul %26, %38, %cst_17 {dimension_numbers = #tpu.dot_dimension_numbers<[1], [0], [0], [1], [0, 0, 1, 1], [], []>} : vector<8x32xbf16>, vector<32x32xbf16>, vector<8x32xf32> -> vector<8x32xf32>
    %c0_18 = arith.constant 0 : index
    %c0_19 = arith.constant 0 : index
    %40 = vector.load %arg5[%c0_18, %c0_19] : memref<1x32xf32, #tpu.memory_space<vmem>>, vector<1x32xf32>
    %41 = vector.broadcast %40 : vector<1x32xf32> to vector<8x32xf32>
    %42 = arith.addf %39, %41 : vector<8x32xf32>
    %43 = vector.shape_cast %42 : vector<8x32xf32> to vector<1x8x32xf32>
    %cst_20 = arith.constant 0.353553385 : f32
    %44 = vector.broadcast %cst_20 : f32 to vector<1x8x32xf32>
    %45 = arith.mulf %43, %44 : vector<1x8x32xf32>
    %46 = arith.truncf %45 : vector<1x8x32xf32> to vector<1x8x32xbf16>
    %47 = vector.extract_strided_slice %46 {offsets = [0, 0, 0], sizes = [1, 8, 8], strides = [1, 1, 1]} : vector<1x8x32xbf16> to vector<1x8x8xbf16>
    %48 = vector.extract_strided_slice %34 {offsets = [0, 0, 0], sizes = [1, 8, 8], strides = [1, 1, 1]} : vector<1x8x32xbf16> to vector<1x8x8xbf16>
    "tpu.trace_start"() <{level = 10 : i32, message = "bqd,bkd->bqk"}> : () -> ()
    %cst_21 = arith.constant dense<0.000000e+00> : vector<1x8x8xf32>
    %49 = tpu.matmul %47, %48, %cst_21 {dimension_numbers = #tpu.dot_dimension_numbers<[2], [2], [1], [1], [0, 0, 0, 1, 1, 1], [0], [0]>} : vector<1x8x8xbf16>, vector<1x8x8xbf16>, vector<1x8x8xf32> -> vector<1x8x8xf32>
    "tpu.trace_stop"() : () -> ()
    %cst_22 = arith.constant dense<0xFF800000> : vector<1x8xf32>
    %50 = vector.multi_reduction <maximumf>, %49, %cst_22 [2] : vector<1x8x8xf32> to vector<1x8xf32>
    %51 = vector.shape_cast %50 : vector<1x8xf32> to vector<1x8x1xf32>
    %52 = vector.broadcast %51 : vector<1x8x1xf32> to vector<1x8x8xf32>
    %53 = arith.subf %49, %52 : vector<1x8x8xf32>
    %54 = math.exp %53 : vector<1x8x8xf32>
    %cst_23 = arith.constant dense<0.000000e+00> : vector<1x8xf32>
    %55 = vector.multi_reduction <add>, %54, %cst_23 [2] : vector<1x8x8xf32> to vector<1x8xf32>
    %56 = vector.shape_cast %55 : vector<1x8xf32> to vector<1x8x1xf32>
    %57 = tpu.reciprocal %56 {approx = true} : vector<1x8x1xf32> -> vector<1x8x1xf32>
    %58 = vector.broadcast %57 : vector<1x8x1xf32> to vector<1x8x8xf32>
    %59 = arith.mulf %54, %58 : vector<1x8x8xf32>
    %60 = arith.truncf %59 : vector<1x8x8xf32> to vector<1x8x8xbf16>
    %61 = vector.extract_strided_slice %37 {offsets = [0, 0, 0], sizes = [1, 8, 8], strides = [1, 1, 1]} : vector<1x8x32xbf16> to vector<1x8x8xbf16>
    "tpu.trace_start"() <{level = 10 : i32, message = "bqk,bkd->bqd"}> : () -> ()
    %cst_24 = arith.constant dense<0.000000e+00> : vector<1x8x8xf32>
    %62 = tpu.matmul %60, %61, %cst_24 {dimension_numbers = #tpu.dot_dimension_numbers<[2], [1], [1], [2], [0, 0, 0, 1, 1, 2], [0], [0]>} : vector<1x8x8xbf16>, vector<1x8x8xbf16>, vector<1x8x8xf32> -> vector<1x8x8xf32>
    "tpu.trace_stop"() : () -> ()
    %63 = vector.extract_strided_slice %46 {offsets = [0, 0, 8], sizes = [1, 8, 8], strides = [1, 1, 1]} : vector<1x8x32xbf16> to vector<1x8x8xbf16>
    %64 = vector.extract_strided_slice %34 {offsets = [0, 0, 8], sizes = [1, 8, 8], strides = [1, 1, 1]} : vector<1x8x32xbf16> to vector<1x8x8xbf16>
    "tpu.trace_start"() <{level = 10 : i32, message = "bqd,bkd->bqk"}> : () -> ()
    %cst_25 = arith.constant dense<0.000000e+00> : vector<1x8x8xf32>
    %65 = tpu.matmul %63, %64, %cst_25 {dimension_numbers = #tpu.dot_dimension_numbers<[2], [2], [1], [1], [0, 0, 0, 1, 1, 1], [0], [0]>} : vector<1x8x8xbf16>, vector<1x8x8xbf16>, vector<1x8x8xf32> -> vector<1x8x8xf32>
    "tpu.trace_stop"() : () -> ()
    %cst_26 = arith.constant dense<0xFF800000> : vector<1x8xf32>
    %66 = vector.multi_reduction <maximumf>, %65, %cst_26 [2] : vector<1x8x8xf32> to vector<1x8xf32>
    %67 = vector.shape_cast %66 : vector<1x8xf32> to vector<1x8x1xf32>
    %68 = vector.broadcast %67 : vector<1x8x1xf32> to vector<1x8x8xf32>
    %69 = arith.subf %65, %68 : vector<1x8x8xf32>
    %70 = math.exp %69 : vector<1x8x8xf32>
    %cst_27 = arith.constant dense<0.000000e+00> : vector<1x8xf32>
    %71 = vector.multi_reduction <add>, %70, %cst_27 [2] : vector<1x8x8xf32> to vector<1x8xf32>
    %72 = vector.shape_cast %71 : vector<1x8xf32> to vector<1x8x1xf32>
    %73 = tpu.reciprocal %72 {approx = true} : vector<1x8x1xf32> -> vector<1x8x1xf32>
    %74 = vector.broadcast %73 : vector<1x8x1xf32> to vector<1x8x8xf32>
    %75 = arith.mulf %70, %74 : vector<1x8x8xf32>
    %76 = arith.truncf %75 : vector<1x8x8xf32> to vector<1x8x8xbf16>
    %77 = vector.extract_strided_slice %37 {offsets = [0, 0, 8], sizes = [1, 8, 8], strides = [1, 1, 1]} : vector<1x8x32xbf16> to vector<1x8x8xbf16>
    "tpu.trace_start"() <{level = 10 : i32, message = "bqk,bkd->bqd"}> : () -> ()
    %cst_28 = arith.constant dense<0.000000e+00> : vector<1x8x8xf32>
    %78 = tpu.matmul %76, %77, %cst_28 {dimension_numbers = #tpu.dot_dimension_numbers<[2], [1], [1], [2], [0, 0, 0, 1, 1, 2], [0], [0]>} : vector<1x8x8xbf16>, vector<1x8x8xbf16>, vector<1x8x8xf32> -> vector<1x8x8xf32>
    "tpu.trace_stop"() : () -> ()
    %79 = vector.extract_strided_slice %46 {offsets = [0, 0, 16], sizes = [1, 8, 8], strides = [1, 1, 1]} : vector<1x8x32xbf16> to vector<1x8x8xbf16>
    %80 = vector.extract_strided_slice %34 {offsets = [0, 0, 16], sizes = [1, 8, 8], strides = [1, 1, 1]} : vector<1x8x32xbf16> to vector<1x8x8xbf16>
    "tpu.trace_start"() <{level = 10 : i32, message = "bqd,bkd->bqk"}> : () -> ()
    %cst_29 = arith.constant dense<0.000000e+00> : vector<1x8x8xf32>
    %81 = tpu.matmul %79, %80, %cst_29 {dimension_numbers = #tpu.dot_dimension_numbers<[2], [2], [1], [1], [0, 0, 0, 1, 1, 1], [0], [0]>} : vector<1x8x8xbf16>, vector<1x8x8xbf16>, vector<1x8x8xf32> -> vector<1x8x8xf32>
    "tpu.trace_stop"() : () -> ()
    %cst_30 = arith.constant dense<0xFF800000> : vector<1x8xf32>
    %82 = vector.multi_reduction <maximumf>, %81, %cst_30 [2] : vector<1x8x8xf32> to vector<1x8xf32>
    %83 = vector.shape_cast %82 : vector<1x8xf32> to vector<1x8x1xf32>
    %84 = vector.broadcast %83 : vector<1x8x1xf32> to vector<1x8x8xf32>
    %85 = arith.subf %81, %84 : vector<1x8x8xf32>
    %86 = math.exp %85 : vector<1x8x8xf32>
    %cst_31 = arith.constant dense<0.000000e+00> : vector<1x8xf32>
    %87 = vector.multi_reduction <add>, %86, %cst_31 [2] : vector<1x8x8xf32> to vector<1x8xf32>
    %88 = vector.shape_cast %87 : vector<1x8xf32> to vector<1x8x1xf32>
    %89 = tpu.reciprocal %88 {approx = true} : vector<1x8x1xf32> -> vector<1x8x1xf32>
    %90 = vector.broadcast %89 : vector<1x8x1xf32> to vector<1x8x8xf32>
    %91 = arith.mulf %86, %90 : vector<1x8x8xf32>
    %92 = arith.truncf %91 : vector<1x8x8xf32> to vector<1x8x8xbf16>
    %93 = vector.extract_strided_slice %37 {offsets = [0, 0, 16], sizes = [1, 8, 8], strides = [1, 1, 1]} : vector<1x8x32xbf16> to vector<1x8x8xbf16>
    "tpu.trace_start"() <{level = 10 : i32, message = "bqk,bkd->bqd"}> : () -> ()
    %cst_32 = arith.constant dense<0.000000e+00> : vector<1x8x8xf32>
    %94 = tpu.matmul %92, %93, %cst_32 {dimension_numbers = #tpu.dot_dimension_numbers<[2], [1], [1], [2], [0, 0, 0, 1, 1, 2], [0], [0]>} : vector<1x8x8xbf16>, vector<1x8x8xbf16>, vector<1x8x8xf32> -> vector<1x8x8xf32>
    "tpu.trace_stop"() : () -> ()
    %95 = vector.extract_strided_slice %46 {offsets = [0, 0, 24], sizes = [1, 8, 8], strides = [1, 1, 1]} : vector<1x8x32xbf16> to vector<1x8x8xbf16>
    %96 = vector.extract_strided_slice %34 {offsets = [0, 0, 24], sizes = [1, 8, 8], strides = [1, 1, 1]} : vector<1x8x32xbf16> to vector<1x8x8xbf16>
    "tpu.trace_start"() <{level = 10 : i32, message = "bqd,bkd->bqk"}> : () -> ()
    %cst_33 = arith.constant dense<0.000000e+00> : vector<1x8x8xf32>
    %97 = tpu.matmul %95, %96, %cst_33 {dimension_numbers = #tpu.dot_dimension_numbers<[2], [2], [1], [1], [0, 0, 0, 1, 1, 1], [0], [0]>} : vector<1x8x8xbf16>, vector<1x8x8xbf16>, vector<1x8x8xf32> -> vector<1x8x8xf32>
    "tpu.trace_stop"() : () -> ()
    %cst_34 = arith.constant dense<0xFF800000> : vector<1x8xf32>
    %98 = vector.multi_reduction <maximumf>, %97, %cst_34 [2] : vector<1x8x8xf32> to vector<1x8xf32>
    %99 = vector.shape_cast %98 : vector<1x8xf32> to vector<1x8x1xf32>
    %100 = vector.broadcast %99 : vector<1x8x1xf32> to vector<1x8x8xf32>
    %101 = arith.subf %97, %100 : vector<1x8x8xf32>
    %102 = math.exp %101 : vector<1x8x8xf32>
    %cst_35 = arith.constant dense<0.000000e+00> : vector<1x8xf32>
    %103 = vector.multi_reduction <add>, %102, %cst_35 [2] : vector<1x8x8xf32> to vector<1x8xf32>
    %104 = vector.shape_cast %103 : vector<1x8xf32> to vector<1x8x1xf32>
    %105 = tpu.reciprocal %104 {approx = true} : vector<1x8x1xf32> -> vector<1x8x1xf32>
    %106 = vector.broadcast %105 : vector<1x8x1xf32> to vector<1x8x8xf32>
    %107 = arith.mulf %102, %106 : vector<1x8x8xf32>
    %108 = arith.truncf %107 : vector<1x8x8xf32> to vector<1x8x8xbf16>
    %109 = vector.extract_strided_slice %37 {offsets = [0, 0, 24], sizes = [1, 8, 8], strides = [1, 1, 1]} : vector<1x8x32xbf16> to vector<1x8x8xbf16>
    "tpu.trace_start"() <{level = 10 : i32, message = "bqk,bkd->bqd"}> : () -> ()
    %cst_36 = arith.constant dense<0.000000e+00> : vector<1x8x8xf32>
    %110 = tpu.matmul %108, %109, %cst_36 {dimension_numbers = #tpu.dot_dimension_numbers<[2], [1], [1], [2], [0, 0, 0, 1, 1, 2], [0], [0]>} : vector<1x8x8xbf16>, vector<1x8x8xbf16>, vector<1x8x8xf32> -> vector<1x8x8xf32>
    "tpu.trace_stop"() : () -> ()
    %111 = tpu.concatenate %62, %78, %94, %110 in 2 : vector<1x8x8xf32>, vector<1x8x8xf32>, vector<1x8x8xf32>, vector<1x8x8xf32> -> vector<1x8x32xf32>
    %112 = vector.shape_cast %111 : vector<1x8x32xf32> to vector<8x32xf32>
    %113 = arith.truncf %112 : vector<8x32xf32> to vector<8x32xbf16>
    %c0_37 = arith.constant 0 : index
    %c0_38 = arith.constant 0 : index
    %114 = vector.load %arg8[%c0_37, %c0_38] : memref<32x32xbf16, #tpu.memory_space<vmem>>, vector<32x32xbf16>
    %cst_39 = arith.constant dense<0.000000e+00> : vector<8x32xf32>
    %115 = tpu.matmul %113, %114, %cst_39 {dimension_numbers = #tpu.dot_dimension_numbers<[1], [0], [0], [1], [0, 0, 1, 1], [], []>} : vector<8x32xbf16>, vector<32x32xbf16>, vector<8x32xf32> -> vector<8x32xf32>
    %c0_40 = arith.constant 0 : index
    %c0_41 = arith.constant 0 : index
    %116 = vector.load %arg9[%c0_40, %c0_41] : memref<1x32xf32, #tpu.memory_space<vmem>>, vector<1x32xf32>
    %117 = vector.broadcast %116 : vector<1x32xf32> to vector<8x32xf32>
    %118 = arith.addf %115, %117 : vector<8x32xf32>
    %119 = vector.shape_cast %118 : vector<8x32xf32> to vector<1x8x32xf32>
    %120 = arith.addf %0, %119 : vector<1x8x32xf32>
    %c0_42 = arith.constant 0 : index
    %c0_43 = arith.constant 0 : index
    %121 = vector.load %arg10[%c0_42, %c0_43] : memref<1x32xf32, #tpu.memory_space<vmem>>, vector<1x32xf32>
    %c0_44 = arith.constant 0 : index
    %c0_45 = arith.constant 0 : index
    %122 = vector.load %arg11[%c0_44, %c0_45] : memref<1x32xf32, #tpu.memory_space<vmem>>, vector<1x32xf32>
    %cst_46 = arith.constant dense<0.000000e+00> : vector<1x8xf32>
    %123 = vector.multi_reduction <add>, %120, %cst_46 [2] : vector<1x8x32xf32> to vector<1x8xf32>
    %124 = vector.shape_cast %123 : vector<1x8xf32> to vector<1x8x1xf32>
    %cst_47 = arith.constant 3.200000e+01 : f32
    %125 = vector.broadcast %cst_47 : f32 to vector<1x8x1xf32>
    %126 = arith.divf %124, %125 : vector<1x8x1xf32>
    %127 = vector.broadcast %126 : vector<1x8x1xf32> to vector<1x8x32xf32>
    %128 = arith.subf %120, %127 : vector<1x8x32xf32>
    %129 = arith.mulf %128, %128 : vector<1x8x32xf32>
    %cst_48 = arith.constant dense<0.000000e+00> : vector<1x8xf32>
    %130 = vector.multi_reduction <add>, %129, %cst_48 [2] : vector<1x8x32xf32> to vector<1x8xf32>
    %131 = vector.shape_cast %130 : vector<1x8xf32> to vector<1x8x1xf32>
    %cst_49 = arith.constant 3.200000e+01 : f32
    %132 = vector.broadcast %cst_49 : f32 to vector<1x8x1xf32>
    %133 = arith.divf %131, %132 : vector<1x8x1xf32>
    %cst_50 = arith.constant 9.99999974E-6 : f32
    %134 = vector.broadcast %cst_50 : f32 to vector<1x8x1xf32>
    %135 = arith.addf %133, %134 : vector<1x8x1xf32>
    %136 = math.rsqrt %135 : vector<1x8x1xf32>
    %137 = vector.broadcast %136 : vector<1x8x1xf32> to vector<1x8x32xf32>
    %138 = arith.mulf %128, %137 : vector<1x8x32xf32>
    %139 = vector.shape_cast %121 : vector<1x32xf32> to vector<1x1x32xf32>
    %140 = vector.broadcast %139 : vector<1x1x32xf32> to vector<1x8x32xf32>
    %141 = arith.mulf %138, %140 : vector<1x8x32xf32>
    %142 = vector.shape_cast %122 : vector<1x32xf32> to vector<1x1x32xf32>
    %143 = vector.broadcast %142 : vector<1x1x32xf32> to vector<1x8x32xf32>
    %144 = arith.addf %141, %143 : vector<1x8x32xf32>
    %145 = vector.shape_cast %144 : vector<1x8x32xf32> to vector<8x32xf32>
    %146 = arith.truncf %145 : vector<8x32xf32> to vector<8x32xbf16>
    %c0_51 = arith.constant 0 : index
    %c0_52 = arith.constant 0 : index
    %147 = vector.load %arg12[%c0_51, %c0_52] : memref<32x64xbf16, #tpu.memory_space<vmem>>, vector<32x64xbf16>
    %cst_53 = arith.constant dense<0.000000e+00> : vector<8x64xf32>
    %148 = tpu.matmul %146, %147, %cst_53 {dimension_numbers = #tpu.dot_dimension_numbers<[1], [0], [0], [1], [0, 0, 1, 1], [], []>} : vector<8x32xbf16>, vector<32x64xbf16>, vector<8x64xf32> -> vector<8x64xf32>
    %c0_54 = arith.constant 0 : index
    %c0_55 = arith.constant 0 : index
    %149 = vector.load %arg13[%c0_54, %c0_55] : memref<1x64xf32, #tpu.memory_space<vmem>>, vector<1x64xf32>
    %150 = vector.broadcast %149 : vector<1x64xf32> to vector<8x64xf32>
    %151 = arith.addf %148, %150 : vector<8x64xf32>
    %cst_56 = arith.constant 5.000000e-01 : f32
    %152 = vector.broadcast %cst_56 : f32 to vector<8x64xf32>
    %153 = arith.mulf %152, %151 : vector<8x64xf32>
    %cst_57 = arith.constant 4.471500e-02 : f32
    %154 = vector.broadcast %cst_57 : f32 to vector<8x64xf32>
    %155 = arith.mulf %154, %151 : vector<8x64xf32>
    %156 = arith.mulf %155, %151 : vector<8x64xf32>
    %157 = arith.mulf %156, %151 : vector<8x64xf32>
    %158 = arith.addf %151, %157 : vector<8x64xf32>
    %cst_58 = arith.constant 0.797884583 : f32
    %159 = vector.broadcast %cst_58 : f32 to vector<8x64xf32>
    %160 = arith.mulf %159, %158 : vector<8x64xf32>
    %161 = math.tanh %160 : vector<8x64xf32>
    %cst_59 = arith.constant 1.000000e+00 : f32
    %162 = vector.broadcast %cst_59 : f32 to vector<8x64xf32>
    %163 = arith.addf %162, %161 : vector<8x64xf32>
    %164 = arith.mulf %153, %163 : vector<8x64xf32>
    %165 = arith.truncf %164 : vector<8x64xf32> to vector<8x64xbf16>
    %c0_60 = arith.constant 0 : index
    %c0_61 = arith.constant 0 : index
    %166 = vector.load %arg14[%c0_60, %c0_61] : memref<64x32xbf16, #tpu.memory_space<vmem>>, vector<64x32xbf16>
    %cst_62 = arith.constant dense<0.000000e+00> : vector<8x32xf32>
    %167 = tpu.matmul %165, %166, %cst_62 {dimension_numbers = #tpu.dot_dimension_numbers<[1], [0], [0], [1], [0, 0, 1, 1], [], []>} : vector<8x64xbf16>, vector<64x32xbf16>, vector<8x32xf32> -> vector<8x32xf32>
    %c0_63 = arith.constant 0 : index
    %c0_64 = arith.constant 0 : index
    %168 = vector.load %arg15[%c0_63, %c0_64] : memref<1x32xf32, #tpu.memory_space<vmem>>, vector<1x32xf32>
    %169 = vector.broadcast %168 : vector<1x32xf32> to vector<8x32xf32>
    %170 = arith.addf %167, %169 : vector<8x32xf32>
    %171 = vector.shape_cast %170 : vector<8x32xf32> to vector<1x8x32xf32>
    %172 = arith.addf %120, %171 : vector<1x8x32xf32>
    %c0_65 = arith.constant 0 : index
    %c0_66 = arith.constant 0 : index
    %c0_67 = arith.constant 0 : index
    %173 = vector.load %arg16[%c0_65, %c0_66, %c0_67] : memref<1x8x32xf32, #tpu.memory_space<vmem>>, vector<1x8x32xf32>
    tpu.vector_store %arg16[%c0_65, %c0_66, %c0_67], %172 {strides = array<i32>} : memref<1x8x32xf32, #tpu.memory_space<vmem>>, vector<1x8x32xf32>,
    return
  }
  func.func @transform_0(%arg0: i32) -> (i32, i32, i32) {
    %c0_i32 = arith.constant 0 : i32
    %c0_i32_0 = arith.constant 0 : i32
    %c0_i32_1 = arith.constant 0 : i32
    return %arg0, %c0_i32, %c0_i32_0 : i32, i32, i32
  }
  func.func @transform_1(%arg0: i32) -> (i32, i32) {
    %c0_i32 = arith.constant 0 : i32
    %c0_i32_0 = arith.constant 0 : i32
    %c0_i32_1 = arith.constant 0 : i32
    return %c0_i32, %c0_i32_0 : i32, i32
  }
  func.func @transform_2(%arg0: i32) -> (i32, i32) {
    %c0_i32 = arith.constant 0 : i32
    %c0_i32_0 = arith.constant 0 : i32
    %c0_i32_1 = arith.constant 0 : i32
    return %c0_i32, %c0_i32_0 : i32, i32
  }
  func.func @transform_3(%arg0: i32) -> (i32, i32) {
    %c0_i32 = arith.constant 0 : i32
    %c0_i32_0 = arith.constant 0 : i32
    %c0_i32_1 = arith.constant 0 : i32
    return %c0_i32, %c0_i32_0 : i32, i32
  }
  func.func @transform_4(%arg0: i32) -> (i32, i32) {
    %c0_i32 = arith.constant 0 : i32
    %c0_i32_0 = arith.constant 0 : i32
    %c0_i32_1 = arith.constant 0 : i32
    return %c0_i32, %c0_i32_0 : i32, i32
  }
  func.func @transform_5(%arg0: i32) -> (i32, i32) {
    %c0_i32 = arith.constant 0 : i32
    %c0_i32_0 = arith.constant 0 : i32
    %c0_i32_1 = arith.constant 0 : i32
    return %c0_i32, %c0_i32_0 : i32, i32
  }
  func.func @transform_6(%arg0: i32) -> (i32, i32) {
    %c0_i32 = arith.constant 0 : i32
    %c0_i32_0 = arith.constant 0 : i32
    %c0_i32_1 = arith.constant 0 : i32
    return %c0_i32, %c0_i32_0 : i32, i32
  }
  func.func @transform_7(%arg0: i32) -> (i32, i32) {
    %c0_i32 = arith.constant 0 : i32
    %c0_i32_0 = arith.constant 0 : i32
    %c0_i32_1 = arith.constant 0 : i32
    return %c0_i32, %c0_i32_0 : i32, i32
  }
  func.func @transform_8(%arg0: i32) -> (i32, i32) {
    %c0_i32 = arith.constant 0 : i32
    %c0_i32_0 = arith.constant 0 : i32
    %c0_i32_1 = arith.constant 0 : i32
    return %c0_i32, %c0_i32_0 : i32, i32
  }
  func.func @transform_9(%arg0: i32) -> (i32, i32) {
    %c0_i32 = arith.constant 0 : i32
    %c0_i32_0 = arith.constant 0 : i32
    %c0_i32_1 = arith.constant 0 : i32
    return %c0_i32, %c0_i32_0 : i32, i32
  }
  func.func @transform_10(%arg0: i32) -> (i32, i32) {
    %c0_i32 = arith.constant 0 : i32
    %c0_i32_0 = arith.constant 0 : i32
    %c0_i32_1 = arith.constant 0 : i32
    return %c0_i32, %c0_i32_0 : i32, i32
  }
  func.func @transform_11(%arg0: i32) -> (i32, i32) {
    %c0_i32 = arith.constant 0 : i32
    %c0_i32_0 = arith.constant 0 : i32
    %c0_i32_1 = arith.constant 0 : i32
    return %c0_i32, %c0_i32_0 : i32, i32
  }
  func.func @transform_12(%arg0: i32) -> (i32, i32) {
    %c0_i32 = arith.constant 0 : i32
    %c0_i32_0 = arith.constant 0 : i32
    %c0_i32_1 = arith.constant 0 : i32
    return %c0_i32, %c0_i32_0 : i32, i32
  }
  func.func @transform_13(%arg0: i32) -> (i32, i32) {
    %c0_i32 = arith.constant 0 : i32
    %c0_i32_0 = arith.constant 0 : i32
    %c0_i32_1 = arith.constant 0 : i32
    return %c0_i32, %c0_i32_0 : i32, i32
  }
  func.func @transform_14(%arg0: i32) -> (i32, i32) {
    %c0_i32 = arith.constant 0 : i32
    %c0_i32_0 = arith.constant 0 : i32
    %c0_i32_1 = arith.constant 0 : i32
    return %c0_i32, %c0_i32_0 : i32, i32
  }
  func.func @transform_15(%arg0: i32) -> (i32, i32, i32) {
    %c0_i32 = arith.constant 0 : i32
    %c0_i32_0 = arith.constant 0 : i32
    %c0_i32_1 = arith.constant 0 : i32
    return %arg0, %c0_i32, %c0_i32_0 : i32, i32, i32
  }
}

</mosaic_0001>

<llo_original>
// kernel: tpu_custom_call.1
$region0: #{tpu_custom_call.1}
  #allocation0 [shape = 'u32[]', space=smem, size = 0x4, offset = 0x4, fixed_abs, tag = 'smem constant byte address 0x4 - core index']
  #allocation1 [shape = 'u32[144,128]{1,0:T(1,128)}', space=vmem, size = 0x12000, scoped, tag = 'internal scratch']
  %s0 = inlined_call_operand.hbm [shape: f32[2,8,128], index: 0, kind: input, shape index: {}]
  %s1 = inlined_call_operand.hbm [shape: f32[1,8,128], index: 1, kind: input, shape index: {}]
  %s2 = inlined_call_operand.hbm [shape: f32[2,8,128], index: 2, kind: output, shape index: {}]
  %s3 = sld [smem:[#allocation0]]
  $region49: #{tpu_custom_call.1} parent=0
    _
  %s5 = ssub.s32 1, %s3
  %s6 = scalar_select 0, %s5, %s3
  $region1: #{tpu_custom_call.1} parent=0
    #allocation2 [shape = 'u8[8192]{0}', space=vmem, size = 0x2000, scoped, tag = 'input window, operand 0']
    #allocation3 [shape = 's32[2]{0}', space=sflag, size = 0x8, scoped, tag = 'scoped memory for tpu_custom_call.1']
    #allocation4 [shape = 's32[2]{0}', space=sflag, size = 0x8, scoped, tag = 'scoped memory for tpu_custom_call.1']
    #allocation5 [shape = 'u8[4096]{0}', space=vmem, size = 0x1000, scoped, tag = 'input window, operand 1, single buffered']
    #allocation6 [shape = 's32[1]{0}', space=sflag, size = 0x4, scoped, tag = 'scoped memory for tpu_custom_call.1']
    #allocation7 [shape = 'u8[8192]{0}', space=vmem, size = 0x2000, scoped, tag = 'output window, operand 0']
    %7 = vsyncpa [#allocation3], 0
    %s8 = scalar_lea.sflag [#allocation3], 1
    %9 = vsyncpa %s8, 0
    %10 = vsyncpa [#allocation6], 0
    %11 = vsyncpa [#allocation4], 0
    %s12 = scalar_lea.sflag [#allocation4], 1
    %13 = vsyncpa %s12, 0
    loop: start=0, step=1, limit=4
    $region2: #{tpu_custom_call.1} parent=1 // loop_pre_header
      _
    $region3: #{tpu_custom_call.1} parent=1 // loop_header
      %s15 = sphi 0, %s19
      %p16 = scmp.ge.s32.totalorder %s15, 4
      %s25 = sphi 0, %s27
      %s28 = sphi 0, %s25
      %s29 = sphi 0, %s28
      %s45 = sphi 0, %s29
      %s49 = sphi 0, %s49
      %s51 = sphi 0, %s49
      %s52 = sphi 0, %s51
      %s66 = sphi 0, %s52
      %s72 = sphi 0, %s74
      %s75 = sphi 0, %s72
      %s76 = sphi 0, %s75
      %s92 = sphi 0, %s76
    $region4: #{tpu_custom_call.1} parent=1 // loop_header_branch
      %18 = sbr.rel (%p16) target = $region8
    $region5: #{tpu_custom_call.1} parent=1 // loop_body
      %s20 = ssub.s32 %s15, 1
      %s21 = ssub.s32 %s15, 2
      %s22 = sadd.s32 %s15, 1
      %s23 = ssub.s32 %s15, %s22
      %p24 = scmp.eq.s32.totalorder %s23, 0
      %s26 = sadd.s32 %s25, 1
      %s27 = scalar_select %p24, %s25, %s26
      %p30 = pneg %p24
      %p31 = scmp.eq.s32.totalorder %s15, 1
      %p32 = por %p30, %p31
      %p33 = scmp.ne.s32.totalorder %s25, %s28
      %p34 = scmp.eq.s32.totalorder %s15, 0
      %p35 = por %p33, %p34
      %p36 = scmp.ne.s32.totalorder %s25, %s28
      %p37 = scmp.eq.s32.totalorder %s20, 1
      %p38 = por %p36, %p37
      %p39 = scmp.ne.s32.totalorder %s28, %s29
      %p40 = scmp.eq.s32.totalorder %s20, 0
      %p41 = por %p39, %p40
      %p42 = scmp.ne.s32.totalorder %s28, %s29
      %p43 = scmp.eq.s32.totalorder %s21, 1
      %p44 = por %p42, %p43
      %p46 = scmp.ne.s32.totalorder %s29, %s45
      %p47 = scmp.eq.s32.totalorder %s21, 0
      %p48 = por %p46, %p47
      %s50 = sadd.s32 %s49, 1
      %p53 = scmp.eq.s32.totalorder %s15, 1
      %p54 = scmp.ne.s32.totalorder %s49, %s51
      %p55 = scmp.eq.s32.totalorder %s15, 0
      %p56 = por %p54, %p55
      %p57 = scmp.ne.s32.totalorder %s49, %s51
      %p58 = scmp.eq.s32.totalorder %s20, 1
      %p59 = por %p57, %p58
      %p60 = scmp.ne.s32.totalorder %s51, %s52
      %p61 = scmp.eq.s32.totalorder %s20, 0
      %p62 = por %p60, %p61
      %p63 = scmp.ne.s32.totalorder %s51, %s52
      %p64 = scmp.eq.s32.totalorder %s21, 1
      %p65 = por %p63, %p64
      %p67 = scmp.ne.s32.totalorder %s52, %s66
      %p68 = scmp.eq.s32.totalorder %s21, 0
      %p69 = por %p67, %p68
      %s70 = ssub.s32 %s15, %s22
      %p71 = scmp.eq.s32.totalorder %s70, 0
      %s73 = sadd.s32 %s72, 1
      %s74 = scalar_select %p71, %s72, %s73
      %p77 = pneg %p71
      %p78 = scmp.eq.s32.totalorder %s15, 1
      %p79 = por %p77, %p78
      %p80 = scmp.ne.s32.totalorder %s72, %s75
      %p81 = scmp.eq.s32.totalorder %s15, 0
      %p82 = por %p80, %p81
      %p83 = scmp.ne.s32.totalorder %s72, %s75
      %p84 = scmp.eq.s32.totalorder %s20, 1
      %p85 = por %p83, %p84
      %p86 = scmp.ne.s32.totalorder %s75, %s76
      %p87 = scmp.eq.s32.totalorder %s20, 0
      %p88 = por %p86, %p87
      %p89 = scmp.ne.s32.totalorder %s75, %s76
      %p90 = scmp.eq.s32.totalorder %s21, 1
      %p91 = por %p89, %p90
      %p93 = scmp.ne.s32.totalorder %s76, %s92
      %p94 = scmp.eq.s32.totalorder %s21, 0
      %p95 = por %p93, %p94
      %p96 = scmp.le.s32.totalorder 1, %s15
      %p97 = scmp.lt.s32.totalorder %s15, 3
      %p98 = pnand %p96, %p97
      %p99 = pneg %p98
      // Predicated region
      $region9: #{tpu_custom_call.1} parent=5 // pred_check
        _
      $region10: #{tpu_custom_call.1} parent=5 // pred_check_branch
        %101 = sbr.rel (%p98) target = $region12
      $region11: #{tpu_custom_call.1} parent=5 // pred_region
        %s102 = ssub.s32 %s15, 1
        // Predicated region
        $region13: #{tpu_custom_call.1} parent=11 // pred_check
          %p103 = pneg %p62
        $region14: #{tpu_custom_call.1} parent=11 // pred_check_branch
          %105 = sbr.rel (%p103) target = $region16
        $region15: #{tpu_custom_call.1} parent=11 // pred_region
          %s107 = ssub.s32 128, 128
          %108 = vsyncadd [#allocation6], %s107
          %s110 = sshll.u32 [#allocation5], 4
          %s111 = int_to_ptr.vmem [resolvable:$true] %s110
          %113 = dma.hbm_to_vmem [thread:$0]  %s1, 128, %s111, [#allocation6]
        $region16: #{tpu_custom_call.1} parent=11 // pred_fallthru
          _
      $region12: #{tpu_custom_call.1} parent=5 // pred_fallthru
        _
      %p114 = scmp.lt.s32.totalorder %s15, 2
      // Predicated region
      $region17: #{tpu_custom_call.1} parent=5 // pred_check
        %p115 = pneg %p114
      $region18: #{tpu_custom_call.1} parent=5 // pred_check_branch
        %117 = sbr.rel (%p115) target = $region20
      $region19: #{tpu_custom_call.1} parent=5 // pred_region
        // Predicated region
        $region21: #{tpu_custom_call.1} parent=19 // pred_check
          %p118 = pneg %p35
        $region22: #{tpu_custom_call.1} parent=19 // pred_check_branch
          %120 = sbr.rel (%p118) target = $region24
        $region23: #{tpu_custom_call.1} parent=19 // pred_region
          %s121 = sand.u32 %s25, 1
          %s122 = scalar_lea.sflag [#allocation3], %s121
          %s123 = sand.u32 %s25, 1
          %s124 = smul.addr %s123, 8
          %s125 = scalar_lea.vmem [#allocation2], %s124
          %s127 = ssub.s32 128, 128
          %128 = vsyncadd %s122, %s127
          %s129 = smul.addr %s15, 128
          %s130 = scalar_lea.hbm %s0, %s129
          %s132 = sshll.u32 %s125, 4
          %s133 = int_to_ptr.vmem [resolvable:$true] %s132
          %135 = dma.hbm_to_vmem [thread:$0]  %s130, 128, %s133, %s122
        $region24: #{tpu_custom_call.1} parent=19 // pred_fallthru
          _
      $region20: #{tpu_custom_call.1} parent=5 // pred_fallthru
        _
      %p136 = scmp.le.s32.totalorder 1, %s15
      %p137 = scmp.lt.s32.totalorder %s15, 3
      %p138 = pnand %p136, %p137
      %p139 = pneg %p138
      // Predicated region
      $region25: #{tpu_custom_call.1} parent=5 // pred_check
        _
      $region26: #{tpu_custom_call.1} parent=5 // pred_check_branch
        %141 = sbr.rel (%p138) target = $region28
      $region27: #{tpu_custom_call.1} parent=5 // pred_region
        %s142 = ssub.s32 %s15, 1
        %s143 = sand.u32 %s28, 1
        %s144 = scalar_lea.sflag [#allocation3], %s143
        %s145 = sand.u32 %s28, 1
        %s146 = smul.addr %s145, 8
        %s147 = scalar_lea.vmem [#allocation2], %s146
        // Predicated region
        $region29: #{tpu_custom_call.1} parent=27 // pred_check
          %p148 = pneg %p41
        $region30: #{tpu_custom_call.1} parent=27 // pred_check_branch
          %150 = sbr.rel (%p148) target = $region32
        $region31: #{tpu_custom_call.1} parent=27 // pred_region
          %151 = dma.done %s144, 128
        $region32: #{tpu_custom_call.1} parent=27 // pred_fallthru
          _
        // Predicated region
        $region33: #{tpu_custom_call.1} parent=27 // pred_check
          %p152 = pneg %p62
        $region34: #{tpu_custom_call.1} parent=27 // pred_check_branch
          %154 = sbr.rel (%p152) target = $region36
        $region35: #{tpu_custom_call.1} parent=27 // pred_region
          %155 = dma.done [#allocation6], 128
        $region36: #{tpu_custom_call.1} parent=27 // pred_fallthru
          _
        %s156 = sand.u32 %s28, 1
        %s157 = scalar_lea.sflag [#allocation3], %s156
        %s158 = sand.u32 %s28, 1
        %s159 = smul.addr %s158, 8
        %s160 = scalar_lea.vmem [#allocation2], %s159
        %p161 = pneg %p41
        %p162 = pneg %p38
        %p163 = pneg %p62
        %p164 = pneg %p59
        %p165 = pneg %p88
        %p166 = pneg %p85
        %s167 = sand.u32 %s75, 1
        %s168 = scalar_lea.sflag [#allocation4], %s167
        %s169 = sand.u32 %s75, 1
        %s170 = smul.addr %s169, 8
        %s171 = scalar_lea.vmem [#allocation7], %s170
        %v172 = vld [vmem:[%s147] sm:$0xff]
        %v173 = vld [vmem:[#allocation5] sm:$0xff]
        %v174 = vadd.f32 %v172, %v173
        %175 = vst [vmem:[%s171] sm:$0xff] %v174
        %s176 = sand.u32 %s75, 1
        %s177 = scalar_lea.sflag [#allocation4], %s176
        %s178 = sand.u32 %s75, 1
        %s179 = smul.addr %s178, 8
        %s180 = scalar_lea.vmem [#allocation7], %s179
        // Predicated region
        $region37: #{tpu_custom_call.1} parent=27 // pred_check
          %p181 = pneg %p85
        $region38: #{tpu_custom_call.1} parent=27 // pred_check_branch
          %183 = sbr.rel (%p181) target = $region40
        $region39: #{tpu_custom_call.1} parent=27 // pred_region
          %s185 = ssub.s32 128, 128
          %186 = vsyncadd %s177, %s185
          %s187 = smul.addr %s20, 128
          %s188 = scalar_lea.hbm %s2, %s187
          %s190 = sshll.u32 %s180, 4
          %s191 = int_to_ptr.vmem [resolvable:$true] %s190
          %193 = dma.vmem_to_hbm [thread:$0]  %s191, 128, %s188, %s177
        $region40: #{tpu_custom_call.1} parent=27 // pred_fallthru
          _
      $region28: #{tpu_custom_call.1} parent=5 // pred_fallthru
        _
      %p194 = scmp.le.s32.totalorder 2, %s15
      // Predicated region
      $region41: #{tpu_custom_call.1} parent=5 // pred_check
        %p195 = pneg %p194
      $region42: #{tpu_custom_call.1} parent=5 // pred_check_branch
        %197 = sbr.rel (%p195) target = $region44
      $region43: #{tpu_custom_call.1} parent=5 // pred_region
        %s198 = ssub.s32 %s15, 2
        // Predicated region
        $region45: #{tpu_custom_call.1} parent=43 // pred_check
          %p199 = pneg %p91
        $region46: #{tpu_custom_call.1} parent=43 // pred_check_branch
          %201 = sbr.rel (%p199) target = $region48
        $region47: #{tpu_custom_call.1} parent=43 // pred_region
          %s202 = sand.u32 %s76, 1
          %s203 = scalar_lea.sflag [#allocation4], %s202
          %s204 = sand.u32 %s76, 1
          %s205 = smul.addr %s204, 8
          %s206 = scalar_lea.vmem [#allocation7], %s205
          %207 = dma.done %s203, 128
        $region48: #{tpu_custom_call.1} parent=43 // pred_fallthru
          _
      $region44: #{tpu_custom_call.1} parent=5 // pred_fallthru
        _
    $region6: #{tpu_custom_call.1} parent=1 // loop_footer
      %s19 = sadd.s32 1, %s15
    $region7: #{tpu_custom_call.1} parent=1 // loop_footer_branch
      %14 = sbr.rel target = $region3
    $region8: #{tpu_custom_call.1} parent=1 // loop_exit
      _
    %208 = vsyncpa [#allocation3], 1
    %s209 = scalar_lea.sflag [#allocation3], 1
    %210 = vsyncpa %s209, 1
    %211 = vsyncpa [#allocation6], 1
    %212 = vsyncpa [#allocation4], 1
    %s213 = scalar_lea.sflag [#allocation4], 1
    %214 = vsyncpa %s213, 1

// kernel: tpu_custom_call.1
$region0: #{tpu_custom_call.1}
  #allocation0 [shape = 'u32[]', space=smem, size = 0x4, offset = 0x4, fixed_abs, tag = 'smem constant byte address 0x4 - core index']
  #allocation1 [shape = 'u32[144,128]{1,0:T(1,128)}', space=vmem, size = 0x12000, scoped, tag = 'internal scratch']
  %s0 = inlined_call_operand.vmem [shape: f32[2,8,32], index: 0, kind: input, shape index: {}]
  %s1 = inlined_call_operand.vmem [shape: f32[1,32], index: 1, kind: input, shape index: {}]
  %s2 = inlined_call_operand.vmem [shape: f32[1,32], index: 2, kind: input, shape index: {}]
  %s3 = inlined_call_operand.vmem [shape: bf16[32,32], index: 3, kind: input, shape index: {}]
  %s4 = inlined_call_operand.hbm [shape: f32[1,32], index: 4, kind: input, shape index: {}]
  %s5 = inlined_call_operand.vmem [shape: bf16[32,64], index: 5, kind: input, shape index: {}]
  %s6 = inlined_call_operand.hbm [shape: f32[1,64], index: 6, kind: input, shape index: {}]
  %s7 = inlined_call_operand.hbm [shape: bf16[32,32], index: 7, kind: input, shape index: {}]
  %s8 = inlined_call_operand.hbm [shape: f32[1,32], index: 8, kind: input, shape index: {}]
  %s9 = inlined_call_operand.hbm [shape: f32[1,32], index: 9, kind: input, shape index: {}]
  %s10 = inlined_call_operand.vmem [shape: f32[1,32], index: 10, kind: input, shape index: {}]
  %s11 = inlined_call_operand.vmem [shape: bf16[32,64], index: 11, kind: input, shape index: {}]
  %s12 = inlined_call_operand.vmem [shape: f32[1,64], index: 12, kind: input, shape index: {}]
  %s13 = inlined_call_operand.vmem [shape: bf16[64,32], index: 13, kind: input, shape index: {}]
  %s14 = inlined_call_operand.vmem [shape: f32[1,32], index: 14, kind: input, shape index: {}]
  %s15 = inlined_call_operand.hbm [shape: f32[2,8,32], index: 15, kind: output, shape index: {}]
  %s16 = sld [smem:[#allocation0]]
  $region113: #{tpu_custom_call.1} parent=0
    _
  %s18 = ssub.s32 1, %s16
  %s19 = scalar_select 0, %s18, %s16
  $region1: #{tpu_custom_call.1} parent=0
    #allocation2 [shape = 'u8[512]{0}', space=vmem, size = 0x400, scoped, tag = 'input window, operand 4, single buffered']
    #allocation3 [shape = 's32[2]{0}', space=sflag, size = 0x8, scoped, tag = 'scoped memory for tpu_custom_call.1']
    #allocation4 [shape = 's32[2]{0}', space=sflag, size = 0x8, scoped, tag = 'scoped memory for tpu_custom_call.1']
    #allocation5 [shape = 'u8[512]{0}', space=vmem, size = 0x400, scoped, tag = 'input window, operand 6, single buffered']
    #allocation6 [shape = 's32[1]{0}', space=sflag, size = 0x4, scoped, tag = 'scoped memory for tpu_custom_call.1']
    #allocation7 [shape = 'u8[8192]{0}', space=vmem, size = 0x2000, scoped, tag = 'input window, operand 7, single buffered']
    #allocation8 [shape = 'u8[512]{0}', space=vmem, size = 0x400, scoped, tag = 'input window, operand 8, single buffered']
    #allocation9 [shape = 's32[1]{0}', space=sflag, size = 0x4, scoped, tag = 'scoped memory for tpu_custom_call.1']
    #allocation10 [shape = 'u8[512]{0}', space=vmem, size = 0x400, scoped, tag = 'input window, operand 9, single buffered']
    #allocation11 [shape = 'u8[8192]{0}', space=vmem, size = 0x2000, scoped, tag = 'output window, operand 0']
    %20 = vsyncpa [#allocation3], 0
    %21 = vsyncpa [#allocation6], 0
    %22 = vsyncpa [#allocation9], 0
    %23 = vsyncpa [#allocation4], 0
    %s24 = scalar_lea.sflag [#allocation4], 1
    %25 = vsyncpa %s24, 0
    loop: start=0, step=1, limit=4
    $region2: #{tpu_custom_call.1} parent=1 // loop_pre_header
      _
    $region3: #{tpu_custom_call.1} parent=1 // loop_header
      %s27 = sphi 0, %s31
      %p28 = scmp.ge.s32.totalorder %s27, 4
      %s37 = sphi 0, %s39
      %s40 = sphi 0, %s37
      %s41 = sphi 0, %s40
      %s57 = sphi 0, %s41
      %s61 = sphi 0, %s61
      %s63 = sphi 0, %s61
      %s64 = sphi 0, %s63
      %s78 = sphi 0, %s64
      %s82 = sphi 0, %s82
      %s84 = sphi 0, %s82
      %s85 = sphi 0, %s84
      %s99 = sphi 0, %s85
      %s103 = sphi 0, %s103
      %s105 = sphi 0, %s103
      %s106 = sphi 0, %s105
      %s120 = sphi 0, %s106
      %s124 = sphi 0, %s124
      %s126 = sphi 0, %s124
      %s127 = sphi 0, %s126
      %s141 = sphi 0, %s127
      %s145 = sphi 0, %s145
      %s147 = sphi 0, %s145
      %s148 = sphi 0, %s147
      %s162 = sphi 0, %s148
      %s166 = sphi 0, %s166
      %s168 = sphi 0, %s166
      %s169 = sphi 0, %s168
      %s183 = sphi 0, %s169
      %s187 = sphi 0, %s187
      %s189 = sphi 0, %s187
      %s190 = sphi 0, %s189
      %s204 = sphi 0, %s190
      %s208 = sphi 0, %s208
      %s210 = sphi 0, %s208
      %s211 = sphi 0, %s210
      %s225 = sphi 0, %s211
      %s229 = sphi 0, %s229
      %s231 = sphi 0, %s229
      %s232 = sphi 0, %s231
      %s246 = sphi 0, %s232
      %s250 = sphi 0, %s250
      %s252 = sphi 0, %s250
      %s253 = sphi 0, %s252
      %s267 = sphi 0, %s253
      %s271 = sphi 0, %s271
      %s273 = sphi 0, %s271
      %s274 = sphi 0, %s273
      %s288 = sphi 0, %s274
      %s292 = sphi 0, %s292
      %s294 = sphi 0, %s292
      %s295 = sphi 0, %s294
      %s309 = sphi 0, %s295
      %s313 = sphi 0, %s313
      %s315 = sphi 0, %s313
      %s316 = sphi 0, %s315
      %s330 = sphi 0, %s316
      %s334 = sphi 0, %s334
      %s336 = sphi 0, %s334
      %s337 = sphi 0, %s336
      %s351 = sphi 0, %s337
      %s357 = sphi 0, %s359
      %s360 = sphi 0, %s357
      %s361 = sphi 0, %s360
      %s377 = sphi 0, %s361
    $region4: #{tpu_custom_call.1} parent=1 // loop_header_branch
      %30 = sbr.rel (%p28) target = $region8
    $region5: #{tpu_custom_call.1} parent=1 // loop_body
      %s32 = ssub.s32 %s27, 1
      %s33 = ssub.s32 %s27, 2
      %s34 = sadd.s32 %s27, 1
      %s35 = ssub.s32 %s27, %s34
      %p36 = scmp.eq.s32.totalorder %s35, 0
      %s38 = sadd.s32 %s37, 1
      %s39 = scalar_select %p36, %s37, %s38
      %p42 = pneg %p36
      %p43 = scmp.eq.s32.totalorder %s27, 1
      %p44 = por %p42, %p43
      %p45 = scmp.ne.s32.totalorder %s37, %s40
      %p46 = scmp.eq.s32.totalorder %s27, 0
      %p47 = por %p45, %p46
      %p48 = scmp.ne.s32.totalorder %s37, %s40
      %p49 = scmp.eq.s32.totalorder %s32, 1
      %p50 = por %p48, %p49
      %p51 = scmp.ne.s32.totalorder %s40, %s41
      %p52 = scmp.eq.s32.totalorder %s32, 0
      %p53 = por %p51, %p52
      %p54 = scmp.ne.s32.totalorder %s40, %s41
      %p55 = scmp.eq.s32.totalorder %s33, 1
      %p56 = por %p54, %p55
      %p58 = scmp.ne.s32.totalorder %s41, %s57
      %p59 = scmp.eq.s32.totalorder %s33, 0
      %p60 = por %p58, %p59
      %s62 = sadd.s32 %s61, 1
      %p65 = scmp.eq.s32.totalorder %s27, 1
      %p66 = scmp.ne.s32.totalorder %s61, %s63
      %p67 = scmp.eq.s32.totalorder %s27, 0
      %p68 = por %p66, %p67
      %p69 = scmp.ne.s32.totalorder %s61, %s63
      %p70 = scmp.eq.s32.totalorder %s32, 1
      %p71 = por %p69, %p70
      %p72 = scmp.ne.s32.totalorder %s63, %s64
      %p73 = scmp.eq.s32.totalorder %s32, 0
      %p74 = por %p72, %p73
      %p75 = scmp.ne.s32.totalorder %s63, %s64
      %p76 = scmp.eq.s32.totalorder %s33, 1
      %p77 = por %p75, %p76
      %p79 = scmp.ne.s32.totalorder %s64, %s78
      %p80 = scmp.eq.s32.totalorder %s33, 0
      %p81 = por %p79, %p80
      %s83 = sadd.s32 %s82, 1
      %p86 = scmp.eq.s32.totalorder %s27, 1
      %p87 = scmp.ne.s32.totalorder %s82, %s84
      %p88 = scmp.eq.s32.totalorder %s27, 0
      %p89 = por %p87, %p88
      %p90 = scmp.ne.s32.totalorder %s82, %s84
      %p91 = scmp.eq.s32.totalorder %s32, 1
      %p92 = por %p90, %p91
      %p93 = scmp.ne.s32.totalorder %s84, %s85
      %p94 = scmp.eq.s32.totalorder %s32, 0
      %p95 = por %p93, %p94
      %p96 = scmp.ne.s32.totalorder %s84, %s85
      %p97 = scmp.eq.s32.totalorder %s33, 1
      %p98 = por %p96, %p97
      %p100 = scmp.ne.s32.totalorder %s85, %s99
      %p101 = scmp.eq.s32.totalorder %s33, 0
      %p102 = por %p100, %p101
      %s104 = sadd.s32 %s103, 1
      %p107 = scmp.eq.s32.totalorder %s27, 1
      %p108 = scmp.ne.s32.totalorder %s103, %s105
      %p109 = scmp.eq.s32.totalorder %s27, 0
      %p110 = por %p108, %p109
      %p111 = scmp.ne.s32.totalorder %s103, %s105
      %p112 = scmp.eq.s32.totalorder %s32, 1
      %p113 = por %p111, %p112
      %p114 = scmp.ne.s32.totalorder %s105, %s106
      %p115 = scmp.eq.s32.totalorder %s32, 0
      %p116 = por %p114, %p115
      %p117 = scmp.ne.s32.totalorder %s105, %s106
      %p118 = scmp.eq.s32.totalorder %s33, 1
      %p119 = por %p117, %p118
      %p121 = scmp.ne.s32.totalorder %s106, %s120
      %p122 = scmp.eq.s32.totalorder %s33, 0
      %p123 = por %p121, %p122
      %s125 = sadd.s32 %s124, 1
      %p128 = scmp.eq.s32.totalorder %s27, 1
      %p129 = scmp.ne.s32.totalorder %s124, %s126
      %p130 = scmp.eq.s32.totalorder %s27, 0
      %p131 = por %p129, %p130
      %p132 = scmp.ne.s32.totalorder %s124, %s126
      %p133 = scmp.eq.s32.totalorder %s32, 1
      %p134 = por %p132, %p133
      %p135 = scmp.ne.s32.totalorder %s126, %s127
      %p136 = scmp.eq.s32.totalorder %s32, 0
      %p137 = por %p135, %p136
      %p138 = scmp.ne.s32.totalorder %s126, %s127
      %p139 = scmp.eq.s32.totalorder %s33, 1
      %p140 = por %p138, %p139
      %p142 = scmp.ne.s32.totalorder %s127, %s141
      %p143 = scmp.eq.s32.totalorder %s33, 0
      %p144 = por %p142, %p143
      %s146 = sadd.s32 %s145, 1
      %p149 = scmp.eq.s32.totalorder %s27, 1
      %p150 = scmp.ne.s32.totalorder %s145, %s147
      %p151 = scmp.eq.s32.totalorder %s27, 0
      %p152 = por %p150, %p151
      %p153 = scmp.ne.s32.totalorder %s145, %s147
      %p154 = scmp.eq.s32.totalorder %s32, 1
      %p155 = por %p153, %p154
      %p156 = scmp.ne.s32.totalorder %s147, %s148
      %p157 = scmp.eq.s32.totalorder %s32, 0
      %p158 = por %p156, %p157
      %p159 = scmp.ne.s32.totalorder %s147, %s148
      %p160 = scmp.eq.s32.totalorder %s33, 1
      %p161 = por %p159, %p160
      %p163 = scmp.ne.s32.totalorder %s148, %s162
      %p164 = scmp.eq.s32.totalorder %s33, 0
      %p165 = por %p163, %p164
      %s167 = sadd.s32 %s166, 1
      %p170 = scmp.eq.s32.totalorder %s27, 1
      %p171 = scmp.ne.s32.totalorder %s166, %s168
      %p172 = scmp.eq.s32.totalorder %s27, 0
      %p173 = por %p171, %p172
      %p174 = scmp.ne.s32.totalorder %s166, %s168
      %p175 = scmp.eq.s32.totalorder %s32, 1
      %p176 = por %p174, %p175
      %p177 = scmp.ne.s32.totalorder %s168, %s169
      %p178 = scmp.eq.s32.totalorder %s32, 0
      %p179 = por %p177, %p178
      %p180 = scmp.ne.s32.totalorder %s168, %s169
      %p181 = scmp.eq.s32.totalorder %s33, 1
      %p182 = por %p180, %p181
      %p184 = scmp.ne.s32.totalorder %s169, %s183
      %p185 = scmp.eq.s32.totalorder %s33, 0
      %p186 = por %p184, %p185
      %s188 = sadd.s32 %s187, 1
      %p191 = scmp.eq.s32.totalorder %s27, 1
      %p192 = scmp.ne.s32.totalorder %s187, %s189
      %p193 = scmp.eq.s32.totalorder %s27, 0
      %p194 = por %p192, %p193
      %p195 = scmp.ne.s32.totalorder %s187, %s189
      %p196 = scmp.eq.s32.totalorder %s32, 1
      %p197 = por %p195, %p196
      %p198 = scmp.ne.s32.totalorder %s189, %s190
      %p199 = scmp.eq.s32.totalorder %s32, 0
      %p200 = por %p198, %p199
      %p201 = scmp.ne.s32.totalorder %s189, %s190
      %p202 = scmp.eq.s32.totalorder %s33, 1
      %p203 = por %p201, %p202
      %p205 = scmp.ne.s32.totalorder %s190, %s204
      %p206 = scmp.eq.s32.totalorder %s33, 0
      %p207 = por %p205, %p206
      %s209 = sadd.s32 %s208, 1
      %p212 = scmp.eq.s32.totalorder %s27, 1
      %p213 = scmp.ne.s32.totalorder %s208, %s210
      %p214 = scmp.eq.s32.totalorder %s27, 0
      %p215 = por %p213, %p214
      %p216 = scmp.ne.s32.totalorder %s208, %s210
      %p217 = scmp.eq.s32.totalorder %s32, 1
      %p218 = por %p216, %p217
      %p219 = scmp.ne.s32.totalorder %s210, %s211
      %p220 = scmp.eq.s32.totalorder %s32, 0
      %p221 = por %p219, %p220
      %p222 = scmp.ne.s32.totalorder %s210, %s211
      %p223 = scmp.eq.s32.totalorder %s33, 1
      %p224 = por %p222, %p223
      %p226 = scmp.ne.s32.totalorder %s211, %s225
      %p227 = scmp.eq.s32.totalorder %s33, 0
      %p228 = por %p226, %p227
      %s230 = sadd.s32 %s229, 1
      %p233 = scmp.eq.s32.totalorder %s27, 1
      %p234 = scmp.ne.s32.totalorder %s229, %s231
      %p235 = scmp.eq.s32.totalorder %s27, 0
      %p236 = por %p234, %p235
      %p237 = scmp.ne.s32.totalorder %s229, %s231
      %p238 = scmp.eq.s32.totalorder %s32, 1
      %p239 = por %p237, %p238
      %p240 = scmp.ne.s32.totalorder %s231, %s232
      %p241 = scmp.eq.s32.totalorder %s32, 0
      %p242 = por %p240, %p241
      %p243 = scmp.ne.s32.totalorder %s231, %s232
      %p244 = scmp.eq.s32.totalorder %s33, 1
      %p245 = por %p243, %p244
      %p247 = scmp.ne.s32.totalorder %s232, %s246
      %p248 = scmp.eq.s32.totalorder %s33, 0
      %p249 = por %p247, %p248
      %s251 = sadd.s32 %s250, 1
      %p254 = scmp.eq.s32.totalorder %s27, 1
      %p255 = scmp.ne.s32.totalorder %s250, %s252
      %p256 = scmp.eq.s32.totalorder %s27, 0
      %p257 = por %p255, %p256
      %p258 = scmp.ne.s32.totalorder %s250, %s252
      %p259 = scmp.eq.s32.totalorder %s32, 1
      %p260 = por %p258, %p259
      %p261 = scmp.ne.s32.totalorder %s252, %s253
      %p262 = scmp.eq.s32.totalorder %s32, 0
      %p263 = por %p261, %p262
      %p264 = scmp.ne.s32.totalorder %s252, %s253
      %p265 = scmp.eq.s32.totalorder %s33, 1
      %p266 = por %p264, %p265
      %p268 = scmp.ne.s32.totalorder %s253, %s267
      %p269 = scmp.eq.s32.totalorder %s33, 0
      %p270 = por %p268, %p269
      %s272 = sadd.s32 %s271, 1
      %p275 = scmp.eq.s32.totalorder %s27, 1
      %p276 = scmp.ne.s32.totalorder %s271, %s273
      %p277 = scmp.eq.s32.totalorder %s27, 0
      %p278 = por %p276, %p277
      %p279 = scmp.ne.s32.totalorder %s271, %s273
      %p280 = scmp.eq.s32.totalorder %s32, 1
      %p281 = por %p279, %p280
      %p282 = scmp.ne.s32.totalorder %s273, %s274
      %p283 = scmp.eq.s32.totalorder %s32, 0
      %p284 = por %p282, %p283
      %p285 = scmp.ne.s32.totalorder %s273, %s274
      %p286 = scmp.eq.s32.totalorder %s33, 1
      %p287 = por %p285, %p286
      %p289 = scmp.ne.s32.totalorder %s274, %s288
      %p290 = scmp.eq.s32.totalorder %s33, 0
      %p291 = por %p289, %p290
      %s293 = sadd.s32 %s292, 1
      %p296 = scmp.eq.s32.totalorder %s27, 1
      %p297 = scmp.ne.s32.totalorder %s292, %s294
      %p298 = scmp.eq.s32.totalorder %s27, 0
      %p299 = por %p297, %p298
      %p300 = scmp.ne.s32.totalorder %s292, %s294
      %p301 = scmp.eq.s32.totalorder %s32, 1
      %p302 = por %p300, %p301
      %p303 = scmp.ne.s32.totalorder %s294, %s295
      %p304 = scmp.eq.s32.totalorder %s32, 0
      %p305 = por %p303, %p304
      %p306 = scmp.ne.s32.totalorder %s294, %s295
      %p307 = scmp.eq.s32.totalorder %s33, 1
      %p308 = por %p306, %p307
      %p310 = scmp.ne.s32.totalorder %s295, %s309
      %p311 = scmp.eq.s32.totalorder %s33, 0
      %p312 = por %p310, %p311
      %s314 = sadd.s32 %s313, 1
      %p317 = scmp.eq.s32.totalorder %s27, 1
      %p318 = scmp.ne.s32.totalorder %s313, %s315
      %p319 = scmp.eq.s32.totalorder %s27, 0
      %p320 = por %p318, %p319
      %p321 = scmp.ne.s32.totalorder %s313, %s315
      %p322 = scmp.eq.s32.totalorder %s32, 1
      %p323 = por %p321, %p322
      %p324 = scmp.ne.s32.totalorder %s315, %s316
      %p325 = scmp.eq.s32.totalorder %s32, 0
      %p326 = por %p324, %p325
      %p327 = scmp.ne.s32.totalorder %s315, %s316
      %p328 = scmp.eq.s32.totalorder %s33, 1
      %p329 = por %p327, %p328
      %p331 = scmp.ne.s32.totalorder %s316, %s330
      %p332 = scmp.eq.s32.totalorder %s33, 0
      %p333 = por %p331, %p332
      %s335 = sadd.s32 %s334, 1
      %p338 = scmp.eq.s32.totalorder %s27, 1
      %p339 = scmp.ne.s32.totalorder %s334, %s336
      %p340 = scmp.eq.s32.totalorder %s27, 0
      %p341 = por %p339, %p340
      %p342 = scmp.ne.s32.totalorder %s334, %s336
      %p343 = scmp.eq.s32.totalorder %s32, 1
      %p344 = por %p342, %p343
      %p345 = scmp.ne.s32.totalorder %s336, %s337
      %p346 = scmp.eq.s32.totalorder %s32, 0
      %p347 = por %p345, %p346
      %p348 = scmp.ne.s32.totalorder %s336, %s337
      %p349 = scmp.eq.s32.totalorder %s33, 1
      %p350 = por %p348, %p349
      %p352 = scmp.ne.s32.totalorder %s337, %s351
      %p353 = scmp.eq.s32.totalorder %s33, 0
      %p354 = por %p352, %p353
      %s355 = ssub.s32 %s27, %s34
      %p356 = scmp.eq.s32.totalorder %s355, 0
      %s358 = sadd.s32 %s357, 1
      %s359 = scalar_select %p356, %s357, %s358
      %p362 = pneg %p356
      %p363 = scmp.eq.s32.totalorder %s27, 1
      %p364 = por %p362, %p363
      %p365 = scmp.ne.s32.totalorder %s357, %s360
      %p366 = scmp.eq.s32.totalorder %s27, 0
      %p367 = por %p365, %p366
      %p368 = scmp.ne.s32.totalorder %s357, %s360
      %p369 = scmp.eq.s32.totalorder %s32, 1
      %p370 = por %p368, %p369
      %p371 = scmp.ne.s32.totalorder %s360, %s361
      %p372 = scmp.eq.s32.totalorder %s32, 0
      %p373 = por %p371, %p372
      %p374 = scmp.ne.s32.totalorder %s360, %s361
      %p375 = scmp.eq.s32.totalorder %s33, 1
      %p376 = por %p374, %p375
      %p378 = scmp.ne.s32.totalorder %s361, %s377
      %p379 = scmp.eq.s32.totalorder %s33, 0
      %p380 = por %p378, %p379
      %p381 = scmp.le.s32.totalorder 1, %s27
      %p382 = scmp.lt.s32.totalorder %s27, 3
      %p383 = pnand %p381, %p382
      %p384 = pneg %p383
      // Predicated region
      $region9: #{tpu_custom_call.1} parent=5 // pred_check
        _
      $region10: #{tpu_custom_call.1} parent=5 // pred_check_branch
        %386 = sbr.rel (%p383) target = $region12
      $region11: #{tpu_custom_call.1} parent=5 // pred_region
        %s387 = ssub.s32 %s27, 1
        // Predicated region
        $region13: #{tpu_custom_call.1} parent=11 // pred_check
          %p388 = pneg %p74
        $region14: #{tpu_custom_call.1} parent=11 // pred_check_branch
          %390 = sbr.rel (%p388) target = $region16
        $region15: #{tpu_custom_call.1} parent=11 // pred_region
          _
        $region16: #{tpu_custom_call.1} parent=11 // pred_fallthru
          _
        // Predicated region
        $region17: #{tpu_custom_call.1} parent=11 // pred_check
          %p391 = pneg %p95
        $region18: #{tpu_custom_call.1} parent=11 // pred_check_branch
          %393 = sbr.rel (%p391) target = $region20
        $region19: #{tpu_custom_call.1} parent=11 // pred_region
          _
        $region20: #{tpu_custom_call.1} parent=11 // pred_fallthru
          _
        // Predicated region
        $region21: #{tpu_custom_call.1} parent=11 // pred_check
          %p394 = pneg %p116
        $region22: #{tpu_custom_call.1} parent=11 // pred_check_branch
          %396 = sbr.rel (%p394) target = $region24
        $region23: #{tpu_custom_call.1} parent=11 // pred_region
          _
        $region24: #{tpu_custom_call.1} parent=11 // pred_fallthru
          _
        // Predicated region
        $region25: #{tpu_custom_call.1} parent=11 // pred_check
          %p397 = pneg %p137
        $region26: #{tpu_custom_call.1} parent=11 // pred_check_branch
          %399 = sbr.rel (%p397) target = $region28
        $region27: #{tpu_custom_call.1} parent=11 // pred_region
          %s401 = ssub.s32 16, 16
          %402 = vsyncadd [#allocation3], %s401
          %s404 = sshll.u32 [#allocation2], 4
          %s405 = int_to_ptr.vmem [resolvable:$true] %s404
          %407 = dma.hbm_to_vmem [thread:$0]  %s4, 16, %s405, [#allocation3]
        $region28: #{tpu_custom_call.1} parent=11 // pred_fallthru
          _
        // Predicated region
        $region29: #{tpu_custom_call.1} parent=11 // pred_check
          %p408 = pneg %p158
        $region30: #{tpu_custom_call.1} parent=11 // pred_check_branch
          %410 = sbr.rel (%p408) target = $region32
        $region31: #{tpu_custom_call.1} parent=11 // pred_region
          _
        $region32: #{tpu_custom_call.1} parent=11 // pred_fallthru
          _
        // Predicated region
        $region33: #{tpu_custom_call.1} parent=11 // pred_check
          %p411 = pneg %p179
        $region34: #{tpu_custom_call.1} parent=11 // pred_check_branch
          %413 = sbr.rel (%p411) target = $region36
        $region35: #{tpu_custom_call.1} parent=11 // pred_region
          %s415 = ssub.s32 16, 16
          %416 = vsyncadd [#allocation6], %s415
          %s418 = sshll.u32 [#allocation5], 4
          %s419 = int_to_ptr.vmem [resolvable:$true] %s418
          %421 = dma.hbm_to_vmem [thread:$0]  %s6, 16, %s419, [#allocation6]
        $region36: #{tpu_custom_call.1} parent=11 // pred_fallthru
          _
        // Predicated region
        $region37: #{tpu_custom_call.1} parent=11 // pred_check
          %p422 = pneg %p200
        $region38: #{tpu_custom_call.1} parent=11 // pred_check_branch
          %424 = sbr.rel (%p422) target = $region40
        $region39: #{tpu_custom_call.1} parent=11 // pred_region
          %s426 = ssub.s32 256, 256
          %427 = vsyncadd [#allocation6], %s426
          %s428 = sshll.u32 [#allocation7], 4
          %s429 = int_to_ptr.vmem [resolvable:$true] %s428
          %434 = dma.hbm_to_vmem [thread:$0]  %s7, 256, %s429, [#allocation6], 64, 64, 4
        $region40: #{tpu_custom_call.1} parent=11 // pred_fallthru
          _
        // Predicated region
        $region41: #{tpu_custom_call.1} parent=11 // pred_check
          %p435 = pneg %p221
        $region42: #{tpu_custom_call.1} parent=11 // pred_check_branch
          %437 = sbr.rel (%p435) target = $region44
        $region43: #{tpu_custom_call.1} parent=11 // pred_region
          %s439 = ssub.s32 16, 16
          %440 = vsyncadd [#allocation9], %s439
          %s442 = sshll.u32 [#allocation8], 4
          %s443 = int_to_ptr.vmem [resolvable:$true] %s442
          %445 = dma.hbm_to_vmem [thread:$0]  %s8, 16, %s443, [#allocation9]
        $region44: #{tpu_custom_call.1} parent=11 // pred_fallthru
          _
        // Predicated region
        $region45: #{tpu_custom_call.1} parent=11 // pred_check
          %p446 = pneg %p242
        $region46: #{tpu_custom_call.1} parent=11 // pred_check_branch
          %448 = sbr.rel (%p446) target = $region48
        $region47: #{tpu_custom_call.1} parent=11 // pred_region
          %s450 = ssub.s32 16, 16
          %451 = vsyncadd [#allocation9], %s450
          %s453 = sshll.u32 [#allocation10], 4
          %s454 = int_to_ptr.vmem [resolvable:$true] %s453
          %456 = dma.hbm_to_vmem [thread:$0]  %s9, 16, %s454, [#allocation9]
        $region48: #{tpu_custom_call.1} parent=11 // pred_fallthru
          _
        // Predicated region
        $region49: #{tpu_custom_call.1} parent=11 // pred_check
          %p457 = pneg %p263
        $region50: #{tpu_custom_call.1} parent=11 // pred_check_branch
          %459 = sbr.rel (%p457) target = $region52
        $region51: #{tpu_custom_call.1} parent=11 // pred_region
          _
        $region52: #{tpu_custom_call.1} parent=11 // pred_fallthru
          _
        // Predicated region
        $region53: #{tpu_custom_call.1} parent=11 // pred_check
          %p460 = pneg %p284
        $region54: #{tpu_custom_call.1} parent=11 // pred_check_branch
          %462 = sbr.rel (%p460) target = $region56
        $region55: #{tpu_custom_call.1} parent=11 // pred_region
          _
        $region56: #{tpu_custom_call.1} parent=11 // pred_fallthru
          _
        // Predicated region
        $region57: #{tpu_custom_call.1} parent=11 // pred_check
          %p463 = pneg %p305
        $region58: #{tpu_custom_call.1} parent=11 // pred_check_branch
          %465 = sbr.rel (%p463) target = $region60
        $region59: #{tpu_custom_call.1} parent=11 // pred_region
          _
        $region60: #{tpu_custom_call.1} parent=11 // pred_fallthru
          _
        // Predicated region
        $region61: #{tpu_custom_call.1} parent=11 // pred_check
          %p466 = pneg %p326
        $region62: #{tpu_custom_call.1} parent=11 // pred_check_branch
          %468 = sbr.rel (%p466) target = $region64
        $region63: #{tpu_custom_call.1} parent=11 // pred_region
          _
        $region64: #{tpu_custom_call.1} parent=11 // pred_fallthru
          _
        // Predicated region
        $region65: #{tpu_custom_call.1} parent=11 // pred_check
          %p469 = pneg %p347
        $region66: #{tpu_custom_call.1} parent=11 // pred_check_branch
          %471 = sbr.rel (%p469) target = $region68
        $region67: #{tpu_custom_call.1} parent=11 // pred_region
          _
        $region68: #{tpu_custom_call.1} parent=11 // pred_fallthru
          _
      $region12: #{tpu_custom_call.1} parent=5 // pred_fallthru
        _
      %p472 = scmp.lt.s32.totalorder %s27, 2
      // Predicated region
      $region69: #{tpu_custom_call.1} parent=5 // pred_check
        %p473 = pneg %p472
      $region70: #{tpu_custom_call.1} parent=5 // pred_check_branch
        %475 = sbr.rel (%p473) target = $region72
      $region71: #{tpu_custom_call.1} parent=5 // pred_region
        // Predicated region
        $region73: #{tpu_custom_call.1} parent=71 // pred_check
          %p476 = pneg %p47
        $region74: #{tpu_custom_call.1} parent=71 // pred_check_branch
          %478 = sbr.rel (%p476) target = $region76
        $region75: #{tpu_custom_call.1} parent=71 // pred_region
          %p479 = scmp.lt.s32.totalorder %s27, 1
          %s480 = scalar_select %p479, %s27, 1
          %s481 = smul.addr %s480, 8
          %s482 = scalar_lea.vmem %s0, %s481
        $region76: #{tpu_custom_call.1} parent=71 // pred_fallthru
          _
      $region72: #{tpu_custom_call.1} parent=5 // pred_fallthru
        _
      %p483 = scmp.le.s32.totalorder 1, %s27
      %p484 = scmp.lt.s32.totalorder %s27, 3
      %p485 = pnand %p483, %p484
      %p486 = pneg %p485
      // Predicated region
      $region77: #{tpu_custom_call.1} parent=5 // pred_check
        _
      $region78: #{tpu_custom_call.1} parent=5 // pred_check_branch
        %488 = sbr.rel (%p485) target = $region80
      $region79: #{tpu_custom_call.1} parent=5 // pred_region
        %s489 = ssub.s32 %s27, 1
        // Predicated region
        $region81: #{tpu_custom_call.1} parent=79 // pred_check
          %p490 = pneg %p137
        $region82: #{tpu_custom_call.1} parent=79 // pred_check_branch
          %492 = sbr.rel (%p490) target = $region84
        $region83: #{tpu_custom_call.1} parent=79 // pred_region
          %493 = dma.done [#allocation3], 16
        $region84: #{tpu_custom_call.1} parent=79 // pred_fallthru
          _
        // Predicated region
        $region85: #{tpu_custom_call.1} parent=79 // pred_check
          %p494 = pneg %p179
        $region86: #{tpu_custom_call.1} parent=79 // pred_check_branch
          %496 = sbr.rel (%p494) target = $region88
        $region87: #{tpu_custom_call.1} parent=79 // pred_region
          %497 = dma.done [#allocation6], 16
        $region88: #{tpu_custom_call.1} parent=79 // pred_fallthru
          _
        // Predicated region
        $region89: #{tpu_custom_call.1} parent=79 // pred_check
          %p498 = pneg %p200
        $region90: #{tpu_custom_call.1} parent=79 // pred_check_branch
          %500 = sbr.rel (%p498) target = $region92
        $region91: #{tpu_custom_call.1} parent=79 // pred_region
          %501 = dma.done [#allocation6], 256
        $region92: #{tpu_custom_call.1} parent=79 // pred_fallthru
          _
        // Predicated region
        $region93: #{tpu_custom_call.1} parent=79 // pred_check
          %p502 = pneg %p221
        $region94: #{tpu_custom_call.1} parent=79 // pred_check_branch
          %504 = sbr.rel (%p502) target = $region96
        $region95: #{tpu_custom_call.1} parent=79 // pred_region
          %505 = dma.done [#allocation9], 16
        $region96: #{tpu_custom_call.1} parent=79 // pred_fallthru
          _
        // Predicated region
        $region97: #{tpu_custom_call.1} parent=79 // pred_check
          %p506 = pneg %p242
        $region98: #{tpu_custom_call.1} parent=79 // pred_check_branch
          %508 = sbr.rel (%p506) target = $region100
        $region99: #{tpu_custom_call.1} parent=79 // pred_region
          %509 = dma.done [#allocation9], 16
        $region100: #{tpu_custom_call.1} parent=79 // pred_fallthru
          _
        %p510 = scmp.lt.s32.totalorder %s32, 1
        %s511 = scalar_select %p510, %s32, 1
        %s512 = smul.addr %s511, 8
        %s513 = scalar_lea.vmem %s0, %s512
        %p514 = pneg %p53
        %p515 = pneg %p50
        %p516 = pneg %p74
        %p517 = pneg %p71
        %p518 = pneg %p95
        %p519 = pneg %p92
        %p520 = pneg %p116
        %p521 = pneg %p113
        %p522 = pneg %p137
        %p523 = pneg %p134
        %p524 = pneg %p158
        %p525 = pneg %p155
        %p526 = pneg %p179
        %p527 = pneg %p176
        %p528 = pneg %p200
        %p529 = pneg %p197
        %p530 = pneg %p221
        %p531 = pneg %p218
        %p532 = pneg %p242
        %p533 = pneg %p239
        %p534 = pneg %p263
        %p535 = pneg %p260
        %p536 = pneg %p284
        %p537 = pneg %p281
        %p538 = pneg %p305
        %p539 = pneg %p302
        %p540 = pneg %p326
        %p541 = pneg %p323
        %p542 = pneg %p347
        %p543 = pneg %p344
        %p544 = pneg %p373
        %p545 = pneg %p370
        %s546 = sand.u32 %s360, 1
        %s547 = scalar_lea.sflag [#allocation4], %s546
        %s548 = sand.u32 %s360, 1
        %s549 = smul.addr %s548, 8
        %s550 = scalar_lea.vmem [#allocation11], %s549
        %p551 = scmp.lt.s32.totalorder %s32, 1
        %s552 = scalar_select %p551, %s32, 1
        %s553 = smul.addr %s552, 8
        %s554 = scalar_lea.vmem %s0, %s553
        %v556 = vld [vmem:[%s554] sm:$0xff]
        %v557 = vld [vmem:[%s1] sm:$0x1]
        %v558 = vld [vmem:[%s2] sm:$0x1]
        %vm559 = vcmask 261120
        %v560 = vsel %vm559, %v556, 0.0
        %561 = vadd.xlane.f32.xlu0 %v560
        %v562 = vpop.xlane.xlu0 %561
        %v563 = vrcp.pop 32.0
        %v564 = vmul.f32 %v562, %v563
        %v565 = vsub.f32 %v556, %v564
        %v566 = vmul.f32 %v565, %v565
        %v567 = vsel %vm559, %v566, 0.0
        %568 = vadd.xlane.f32.xlu0 %v567
        %v569 = vpop.xlane.xlu0 %568
        %v570 = vmul.f32 %v569, %v563
        %v571 = vadd.f32 %v570, 1e-05
        %v572 = vrsqrt.pop %v571
        %v573 = vmul.f32 %v565, %v572
        %v575 = vlaneseq
        %v576 = vshrl.u32 %v575, 7
        %v577 = vsub.s32 0, %v576
        %v578 = vrot.slane %v557, %v577
        %v580 = vmul.f32 %v573, %v578
        %v582 = vlaneseq
        %v583 = vshrl.u32 %v582, 7
        %v584 = vsub.s32 0, %v583
        %v585 = vrot.slane %v558, %v584
        %v587 = vadd.f32 %v580, %v585
        %v588 = vpack.c.bf16 %v587, %v587
        %v589 = vld [vmem:[%s5] sm:$0xf]
        %v590 = vld [vmem:[%s5 + $0x4] sm:$0xf]
        %v591 = vld [vmem:[%s5 + $0x8] sm:$0xf]
        %v592 = vld [vmem:[%s5 + $0xc] sm:$0xf]
        %v593 = vld [vmem:[#allocation5] sm:$0x1]
        %v595 = vlaneseq
        %v596 = vshrl.u32 %v595, 7
        %v597 = vsub.s32 0, %v596
        %v598 = vrot.slane %v593, %v597
        %v604 = vunpack.c.l.b16 %v589
        %v605 = vunpack.c.l.b16 %v590
        %v606 = vunpack.c.l.b16 %v591
        %v607 = vunpack.c.l.b16 %v592
        %v608 = vpack.c.b16 %v605, %v604
        %v609 = vpack.c.b16 %v607, %v606
        %v613 = vsel %vm559, %v588, 0
        %615 = vmatprep.subr.bf16.mxu0 0
        %616 = vmatpush1.bf16.msra.mxu0 %v608
        %617 = vmatprep.subr.bf16.mxu0 0
        %618 = vmatpush1.bf16.msra.mxu0 %v609
        %619 = vmatprep.subr.bf16.mxu0 0
        %620 = vmatpush1.bf16.msra.mxu0 0
        %621 = vmatprep.subr.bf16.mxu0 0
        %622 = vmatpush1.bf16.msra.mxu0 0
        %623 = vmatprep.subr.bf16.mxu0 0
        %624 = vmatpush1.bf16.msra.mxu0 0
        %625 = vmatprep.subr.bf16.mxu0 0
        %626 = vmatpush1.bf16.msra.mxu0 0
        %627 = vmatprep.subr.bf16.mxu0 0
        %628 = vmatpush1.bf16.msra.mxu0 0
        %629 = vmatprep.subr.bf16.mxu0 0
        %630 = vmatpush1.bf16.msra.mxu0 0
        %631 = vmatprep.subr.bf16.mxu0 0
        %632 = vmatpush1.bf16.msra.mxu0 0
        %633 = vmatprep.subr.bf16.mxu0 0
        %634 = vmatpush1.bf16.msra.mxu0 0
        %635 = vmatprep.subr.bf16.mxu0 0
        %636 = vmatpush1.bf16.msra.mxu0 0
        %637 = vmatprep.subr.bf16.mxu0 0
        %638 = vmatpush1.bf16.msra.mxu0 0
        %639 = vmatprep.subr.bf16.mxu0 0
        %640 = vmatpush1.bf16.msra.mxu0 0
        %641 = vmatprep.subr.bf16.mxu0 0
        %642 = vmatpush1.bf16.msra.mxu0 0
        %643 = vmatprep.subr.bf16.mxu0 0
        %644 = vmatpush1.bf16.msra.mxu0 0
        %645 = vmatprep.subr.bf16.mxu0 0
        %646 = vmatpush1.bf16.msra.mxu0 0
        %647 = vmatprep.mubr.bf16.mxu0 0
        %648 = vmatmul.mubr.bf16.gmra.mrb[0].mxu0 %v613
        %v649 = vpop.f32.mrb[0].mxu0
        %v650 = vadd.f32 %v598, %v649
        %v651 = vpop.f32.mrb[0].mxu0
        %v652 = vpop.f32.mrb[0].mxu0
        %v653 = vpop.f32.mrb[0].mxu0
        %654 = vdwg.mxu0
        %v655 = vpack.c.bf16 %v650, %v650
        %v656 = vld [vmem:[%s3] sm:$0xf]
        %v657 = vld [vmem:[%s3 + $0x4] sm:$0xf]
        %v658 = vld [vmem:[%s3 + $0x8] sm:$0xf]
        %v659 = vld [vmem:[%s3 + $0xc] sm:$0xf]
        %v660 = vld [vmem:[#allocation2] sm:$0x1]
        %v662 = vlaneseq
        %v663 = vshrl.u32 %v662, 7
        %v664 = vsub.s32 0, %v663
        %v665 = vrot.slane %v660, %v664
        %v671 = vunpack.c.l.b16 %v656
        %v672 = vunpack.c.l.b16 %v657
        %v673 = vunpack.c.l.b16 %v658
        %v674 = vunpack.c.l.b16 %v659
        %v675 = vpack.c.b16 %v672, %v671
        %v676 = vpack.c.b16 %v674, %v673
        %679 = vmatprep.subr.bf16.mxu0 0
        %680 = vmatpush1.bf16.msra.mxu0 %v675
        %681 = vmatprep.subr.bf16.mxu0 0
        %682 = vmatpush1.bf16.msra.mxu0 %v676
        %683 = vmatprep.subr.bf16.mxu0 0
        %684 = vmatpush1.bf16.msra.mxu0 0
        %685 = vmatprep.subr.bf16.mxu0 0
        %686 = vmatpush1.bf16.msra.mxu0 0
        %687 = vmatprep.subr.bf16.mxu0 0
        %688 = vmatpush1.bf16.msra.mxu0 0
        %689 = vmatprep.subr.bf16.mxu0 0
        %690 = vmatpush1.bf16.msra.mxu0 0
        %691 = vmatprep.subr.bf16.mxu0 0
        %692 = vmatpush1.bf16.msra.mxu0 0
        %693 = vmatprep.subr.bf16.mxu0 0
        %694 = vmatpush1.bf16.msra.mxu0 0
        %695 = vmatprep.subr.bf16.mxu0 0
        %696 = vmatpush1.bf16.msra.mxu0 0
        %697 = vmatprep.subr.bf16.mxu0 0
        %698 = vmatpush1.bf16.msra.mxu0 0
        %699 = vmatprep.subr.bf16.mxu0 0
        %700 = vmatpush1.bf16.msra.mxu0 0
        %701 = vmatprep.subr.bf16.mxu0 0
        %702 = vmatpush1.bf16.msra.mxu0 0
        %703 = vmatprep.subr.bf16.mxu0 0
        %704 = vmatpush1.bf16.msra.mxu0 0
        %705 = vmatprep.subr.bf16.mxu0 0
        %706 = vmatpush1.bf16.msra.mxu0 0
        %707 = vmatprep.subr.bf16.mxu0 0
        %708 = vmatpush1.bf16.msra.mxu0 0
        %709 = vmatprep.subr.bf16.mxu0 0
        %710 = vmatpush1.bf16.msra.mxu0 0
        %711 = vmatprep.mubr.bf16.mxu0 0
        %712 = vmatmul.mubr.bf16.gmra.mrb[0].mxu0 %v613
        %v713 = vpop.f32.mrb[0].mxu0
        %v714 = vadd.f32 %v665, %v713
        %v715 = vpop.f32.mrb[0].mxu0
        %v716 = vpop.f32.mrb[0].mxu0
        %v717 = vpop.f32.mrb[0].mxu0
        %718 = vdwg.mxu0
        %v719 = vmul.f32 %v714, 0.35355338
        %v720 = vpack.c.bf16 %v719, %v719
        %vm721 = vcmask 64512
        %v723 = vsel %vm721, %v720, 0
        %v726 = vsel %vm721, %v655, 0
        %728 = vmatprep.subr.bf16.mxu0 0
        %729 = vmatpush1.bf16.xpose.msra.mxu0 %v726
        %730 = vmatprep.subr.bf16.mxu0 0
        %731 = vmatpush1.bf16.xpose.msra.mxu0 0
        %732 = vmatprep.subr.bf16.mxu0 0
        %733 = vmatpush1.bf16.xpose.msra.mxu0 0
        %734 = vmatprep.subr.bf16.mxu0 0
        %735 = vmatpush1.bf16.xpose.msra.mxu0 0
        %736 = vmatprep.subr.bf16.mxu0 0
        %737 = vmatpush1.bf16.xpose.msra.mxu0 0
        %738 = vmatprep.subr.bf16.mxu0 0
        %739 = vmatpush1.bf16.xpose.msra.mxu0 0
        %740 = vmatprep.subr.bf16.mxu0 0
        %741 = vmatpush1.bf16.xpose.msra.mxu0 0
        %742 = vmatprep.subr.bf16.mxu0 0
        %743 = vmatpush1.bf16.xpose.msra.mxu0 0
        %744 = vmatprep.subr.bf16.mxu0 0
        %745 = vmatpush1.bf16.xpose.msra.mxu0 0
        %746 = vmatprep.subr.bf16.mxu0 0
        %747 = vmatpush1.bf16.xpose.msra.mxu0 0
        %748 = vmatprep.subr.bf16.mxu0 0
        %749 = vmatpush1.bf16.xpose.msra.mxu0 0
        %750 = vmatprep.subr.bf16.mxu0 0
        %751 = vmatpush1.bf16.xpose.msra.mxu0 0
        %752 = vmatprep.subr.bf16.mxu0 0
        %753 = vmatpush1.bf16.xpose.msra.mxu0 0
        %754 = vmatprep.subr.bf16.mxu0 0
        %755 = vmatpush1.bf16.xpose.msra.mxu0 0
        %756 = vmatprep.subr.bf16.mxu0 0
        %757 = vmatpush1.bf16.xpose.msra.mxu0 0
        %758 = vmatprep.subr.bf16.mxu0 0
        %759 = vmatpush1.bf16.xpose.msra.mxu0 0
        %760 = vmatprep.mubr.bf16.mxu0 0
        %761 = vmatmul.mubr.bf16.gmra.mrb[0].mxu0 %v723
        %v762 = vpop.f32.mrb[0].mxu0
        %v763 = vadd.f32 0.0, %v762
        %v764 = vpop.f32.mrb[0].mxu0
        %v765 = vpop.f32.mrb[0].mxu0
        %v766 = vpop.f32.mrb[0].mxu0
        %767 = vdwg.mxu0
        %v768 = vsel %vm721, %v763, -inf
        %769 = vmax.xlane.f32.xlu0 %v768
        %v770 = vpop.xlane.xlu0 %769
        %v771 = vsub.f32 %v763, %v770
        %v772 = vmul.f32 %v771, 1.442695
        %v773 = vpow.pop %v772
        %v774 = vsel %vm721, %v773, 0.0
        %775 = vadd.xlane.f32.xlu0 %v774
        %v776 = vpop.xlane.xlu0 %775
        %v777 = vrcp.pop %v776
        %v778 = vmul.f32 %v773, %v777
        %v779 = vpack.c.bf16 %v778, %v778
        %781 = vrot.lane.b32.xlu0 %v655, 96
        %v782 = vpop.permute.xlu0 %781
        %v784 = vsel %vm721, %v779, 0
        %vm786 = vcmask 1043456
        %v788 = vsel %vm786, %v782, 0
        %790 = vmatprep.subr.bf16.mxu0 0
        %791 = vmatpush1.bf16.msra.mxu0 %v788
        %792 = vmatprep.subr.bf16.mxu0 0
        %793 = vmatpush1.bf16.msra.mxu0 0
        %794 = vmatprep.subr.bf16.mxu0 0
        %795 = vmatpush1.bf16.msra.mxu0 0
        %796 = vmatprep.subr.bf16.mxu0 0
        %797 = vmatpush1.bf16.msra.mxu0 0
        %798 = vmatprep.subr.bf16.mxu0 0
        %799 = vmatpush1.bf16.msra.mxu0 0
        %800 = vmatprep.subr.bf16.mxu0 0
        %801 = vmatpush1.bf16.msra.mxu0 0
        %802 = vmatprep.subr.bf16.mxu0 0
        %803 = vmatpush1.bf16.msra.mxu0 0
        %804 = vmatprep.subr.bf16.mxu0 0
        %805 = vmatpush1.bf16.msra.mxu0 0
        %806 = vmatprep.subr.bf16.mxu0 0
        %807 = vmatpush1.bf16.msra.mxu0 0
        %808 = vmatprep.subr.bf16.mxu0 0
        %809 = vmatpush1.bf16.msra.mxu0 0
        %810 = vmatprep.subr.bf16.mxu0 0
        %811 = vmatpush1.bf16.msra.mxu0 0
        %812 = vmatprep.subr.bf16.mxu0 0
        %813 = vmatpush1.bf16.msra.mxu0 0
        %814 = vmatprep.subr.bf16.mxu0 0
        %815 = vmatpush1.bf16.msra.mxu0 0
        %816 = vmatprep.subr.bf16.mxu0 0
        %817 = vmatpush1.bf16.msra.mxu0 0
        %818 = vmatprep.subr.bf16.mxu0 0
        %819 = vmatpush1.bf16.msra.mxu0 0
        %820 = vmatprep.subr.bf16.mxu0 0
        %821 = vmatpush1.bf16.msra.mxu0 0
        %822 = vmatprep.mubr.bf16.mxu0 0
        %823 = vmatmul.mubr.bf16.gmra.mrb[0].mxu0 %v784
        %v824 = vpop.f32.mrb[0].mxu0
        %v825 = vadd.f32 0.0, %v824
        %v826 = vpop.f32.mrb[0].mxu0
        %v827 = vpop.f32.mrb[0].mxu0
        %v828 = vpop.f32.mrb[0].mxu0
        %829 = vdwg.mxu0
        %831 = vrot.lane.b32.xlu0 %v720, 120
        %v832 = vpop.permute.xlu0 %831
        %833 = vrot.lane.b32.xlu0 %v655, 120
        %v834 = vpop.permute.xlu0 %833
        %v836 = vsel %vm721, %v832, 0
        %v839 = vsel %vm721, %v834, 0
        %841 = vmatprep.subr.bf16.mxu0 0
        %842 = vmatpush1.bf16.xpose.msra.mxu0 %v839
        %843 = vmatprep.subr.bf16.mxu0 0
        %844 = vmatpush1.bf16.xpose.msra.mxu0 0
        %845 = vmatprep.subr.bf16.mxu0 0
        %846 = vmatpush1.bf16.xpose.msra.mxu0 0
        %847 = vmatprep.subr.bf16.mxu0 0
        %848 = vmatpush1.bf16.xpose.msra.mxu0 0
        %849 = vmatprep.subr.bf16.mxu0 0
        %850 = vmatpush1.bf16.xpose.msra.mxu0 0
        %851 = vmatprep.subr.bf16.mxu0 0
        %852 = vmatpush1.bf16.xpose.msra.mxu0 0
        %853 = vmatprep.subr.bf16.mxu0 0
        %854 = vmatpush1.bf16.xpose.msra.mxu0 0
        %855 = vmatprep.subr.bf16.mxu0 0
        %856 = vmatpush1.bf16.xpose.msra.mxu0 0
        %857 = vmatprep.subr.bf16.mxu0 0
        %858 = vmatpush1.bf16.xpose.msra.mxu0 0
        %859 = vmatprep.subr.bf16.mxu0 0
        %860 = vmatpush1.bf16.xpose.msra.mxu0 0
        %861 = vmatprep.subr.bf16.mxu0 0
        %862 = vmatpush1.bf16.xpose.msra.mxu0 0
        %863 = vmatprep.subr.bf16.mxu0 0
        %864 = vmatpush1.bf16.xpose.msra.mxu0 0
        %865 = vmatprep.subr.bf16.mxu0 0
        %866 = vmatpush1.bf16.xpose.msra.mxu0 0
        %867 = vmatprep.subr.bf16.mxu0 0
        %868 = vmatpush1.bf16.xpose.msra.mxu0 0
        %869 = vmatprep.subr.bf16.mxu0 0
        %870 = vmatpush1.bf16.xpose.msra.mxu0 0
        %871 = vmatprep.subr.bf16.mxu0 0
        %872 = vmatpush1.bf16.xpose.msra.mxu0 0
        %873 = vmatprep.mubr.bf16.mxu0 0
        %874 = vmatmul.mubr.bf16.gmra.mrb[0].mxu0 %v836
        %v875 = vpop.f32.mrb[0].mxu0
        %v876 = vadd.f32 0.0, %v875
        %v877 = vpop.f32.mrb[0].mxu0
        %v878 = vpop.f32.mrb[0].mxu0
        %v879 = vpop.f32.mrb[0].mxu0
        %880 = vdwg.mxu0
        %v881 = vsel %vm721, %v876, -inf
        %882 = vmax.xlane.f32.xlu0 %v881
        %v883 = vpop.xlane.xlu0 %882
        %v884 = vsub.f32 %v876, %v883
        %v885 = vmul.f32 %v884, 1.442695
        %v886 = vpow.pop %v885
        %v887 = vsel %vm721, %v886, 0.0
        %888 = vadd.xlane.f32.xlu0 %v887
        %v889 = vpop.xlane.xlu0 %888
        %v890 = vrcp.pop %v889
        %v891 = vmul.f32 %v886, %v890
        %v892 = vpack.c.bf16 %v891, %v891
        %893 = vrot.lane.b32.xlu0 %v655, 88
        %v894 = vpop.permute.xlu0 %893
        %v896 = vsel %vm721, %v892, 0
        %v899 = vsel %vm786, %v894, 0
        %901 = vmatprep.subr.bf16.mxu0 0
        %902 = vmatpush1.bf16.msra.mxu0 %v899
        %903 = vmatprep.subr.bf16.mxu0 0
        %904 = vmatpush1.bf16.msra.mxu0 0
        %905 = vmatprep.subr.bf16.mxu0 0
        %906 = vmatpush1.bf16.msra.mxu0 0
        %907 = vmatprep.subr.bf16.mxu0 0
        %908 = vmatpush1.bf16.msra.mxu0 0
        %909 = vmatprep.subr.bf16.mxu0 0
        %910 = vmatpush1.bf16.msra.mxu0 0
        %911 = vmatprep.subr.bf16.mxu0 0
        %912 = vmatpush1.bf16.msra.mxu0 0
        %913 = vmatprep.subr.bf16.mxu0 0
        %914 = vmatpush1.bf16.msra.mxu0 0
        %915 = vmatprep.subr.bf16.mxu0 0
        %916 = vmatpush1.bf16.msra.mxu0 0
        %917 = vmatprep.subr.bf16.mxu0 0
        %918 = vmatpush1.bf16.msra.mxu0 0
        %919 = vmatprep.subr.bf16.mxu0 0
        %920 = vmatpush1.bf16.msra.mxu0 0
        %921 = vmatprep.subr.bf16.mxu0 0
        %922 = vmatpush1.bf16.msra.mxu0 0
        %923 = vmatprep.subr.bf16.mxu0 0
        %924 = vmatpush1.bf16.msra.mxu0 0
        %925 = vmatprep.subr.bf16.mxu0 0
        %926 = vmatpush1.bf16.msra.mxu0 0
        %927 = vmatprep.subr.bf16.mxu0 0
        %928 = vmatpush1.bf16.msra.mxu0 0
        %929 = vmatprep.subr.bf16.mxu0 0
        %930 = vmatpush1.bf16.msra.mxu0 0
        %931 = vmatprep.subr.bf16.mxu0 0
        %932 = vmatpush1.bf16.msra.mxu0 0
        %933 = vmatprep.mubr.bf16.mxu0 0
        %934 = vmatmul.mubr.bf16.gmra.mrb[0].mxu0 %v896
        %v935 = vpop.f32.mrb[0].mxu0
        %v936 = vadd.f32 0.0, %v935
        %v937 = vpop.f32.mrb[0].mxu0
        %v938 = vpop.f32.mrb[0].mxu0
        %v939 = vpop.f32.mrb[0].mxu0
        %940 = vdwg.mxu0
        %941 = vrot.lane.b32.xlu0 %v720, 112
        %v942 = vpop.permute.xlu0 %941
        %943 = vrot.lane.b32.xlu0 %v655, 112
        %v944 = vpop.permute.xlu0 %943
        %v946 = vsel %vm721, %v942, 0
        %v949 = vsel %vm721, %v944, 0
        %951 = vmatprep.subr.bf16.mxu0 0
        %952 = vmatpush1.bf16.xpose.msra.mxu0 %v949
        %953 = vmatprep.subr.bf16.mxu0 0
        %954 = vmatpush1.bf16.xpose.msra.mxu0 0
        %955 = vmatprep.subr.bf16.mxu0 0
        %956 = vmatpush1.bf16.xpose.msra.mxu0 0
        %957 = vmatprep.subr.bf16.mxu0 0
        %958 = vmatpush1.bf16.xpose.msra.mxu0 0
        %959 = vmatprep.subr.bf16.mxu0 0
        %960 = vmatpush1.bf16.xpose.msra.mxu0 0
        %961 = vmatprep.subr.bf16.mxu0 0
        %962 = vmatpush1.bf16.xpose.msra.mxu0 0
        %963 = vmatprep.subr.bf16.mxu0 0
        %964 = vmatpush1.bf16.xpose.msra.mxu0 0
        %965 = vmatprep.subr.bf16.mxu0 0
        %966 = vmatpush1.bf16.xpose.msra.mxu0 0
        %967 = vmatprep.subr.bf16.mxu0 0
        %968 = vmatpush1.bf16.xpose.msra.mxu0 0
        %969 = vmatprep.subr.bf16.mxu0 0
        %970 = vmatpush1.bf16.xpose.msra.mxu0 0
        %971 = vmatprep.subr.bf16.mxu0 0
        %972 = vmatpush1.bf16.xpose.msra.mxu0 0
        %973 = vmatprep.subr.bf16.mxu0 0
        %974 = vmatpush1.bf16.xpose.msra.mxu0 0
        %975 = vmatprep.subr.bf16.mxu0 0
        %976 = vmatpush1.bf16.xpose.msra.mxu0 0
        %977 = vmatprep.subr.bf16.mxu0 0
        %978 = vmatpush1.bf16.xpose.msra.mxu0 0
        %979 = vmatprep.subr.bf16.mxu0 0
        %980 = vmatpush1.bf16.xpose.msra.mxu0 0
        %981 = vmatprep.subr.bf16.mxu0 0
        %982 = vmatpush1.bf16.xpose.msra.mxu0 0
        %983 = vmatprep.mubr.bf16.mxu0 0
        %984 = vmatmul.mubr.bf16.gmra.mrb[0].mxu0 %v946
        %v985 = vpop.f32.mrb[0].mxu0
        %v986 = vadd.f32 0.0, %v985
        %v987 = vpop.f32.mrb[0].mxu0
        %v988 = vpop.f32.mrb[0].mxu0
        %v989 = vpop.f32.mrb[0].mxu0
        %990 = vdwg.mxu0
        %v991 = vsel %vm721, %v986, -inf
        %992 = vmax.xlane.f32.xlu0 %v991
        %v993 = vpop.xlane.xlu0 %992
        %v994 = vsub.f32 %v986, %v993
        %v995 = vmul.f32 %v994, 1.442695
        %v996 = vpow.pop %v995
        %v997 = vsel %vm721, %v996, 0.0
        %998 = vadd.xlane.f32.xlu0 %v997
        %v999 = vpop.xlane.xlu0 %998
        %v1000 = vrcp.pop %v999
        %v1001 = vmul.f32 %v996, %v1000
        %v1002 = vpack.c.bf16 %v1001, %v1001
        %1003 = vrot.lane.b32.xlu0 %v655, 80
        %v1004 = vpop.permute.xlu0 %1003
        %v1006 = vsel %vm721, %v1002, 0
        %v1009 = vsel %vm786, %v1004, 0
        %1011 = vmatprep.subr.bf16.mxu0 0
        %1012 = vmatpush1.bf16.msra.mxu0 %v1009
        %1013 = vmatprep.subr.bf16.mxu0 0
        %1014 = vmatpush1.bf16.msra.mxu0 0
        %1015 = vmatprep.subr.bf16.mxu0 0
        %1016 = vmatpush1.bf16.msra.mxu0 0
        %1017 = vmatprep.subr.bf16.mxu0 0
        %1018 = vmatpush1.bf16.msra.mxu0 0
        %1019 = vmatprep.subr.bf16.mxu0 0
        %1020 = vmatpush1.bf16.msra.mxu0 0
        %1021 = vmatprep.subr.bf16.mxu0 0
        %1022 = vmatpush1.bf16.msra.mxu0 0
        %1023 = vmatprep.subr.bf16.mxu0 0
        %1024 = vmatpush1.bf16.msra.mxu0 0
        %1025 = vmatprep.subr.bf16.mxu0 0
        %1026 = vmatpush1.bf16.msra.mxu0 0
        %1027 = vmatprep.subr.bf16.mxu0 0
        %1028 = vmatpush1.bf16.msra.mxu0 0
        %1029 = vmatprep.subr.bf16.mxu0 0
        %1030 = vmatpush1.bf16.msra.mxu0 0
        %1031 = vmatprep.subr.bf16.mxu0 0
        %1032 = vmatpush1.bf16.msra.mxu0 0
        %1033 = vmatprep.subr.bf16.mxu0 0
        %1034 = vmatpush1.bf16.msra.mxu0 0
        %1035 = vmatprep.subr.bf16.mxu0 0
        %1036 = vmatpush1.bf16.msra.mxu0 0
        %1037 = vmatprep.subr.bf16.mxu0 0
        %1038 = vmatpush1.bf16.msra.mxu0 0
        %1039 = vmatprep.subr.bf16.mxu0 0
        %1040 = vmatpush1.bf16.msra.mxu0 0
        %1041 = vmatprep.subr.bf16.mxu0 0
        %1042 = vmatpush1.bf16.msra.mxu0 0
        %1043 = vmatprep.mubr.bf16.mxu0 0
        %1044 = vmatmul.mubr.bf16.gmra.mrb[0].mxu0 %v1006
        %v1045 = vpop.f32.mrb[0].mxu0
        %v1046 = vadd.f32 0.0, %v1045
        %v1047 = vpop.f32.mrb[0].mxu0
        %v1048 = vpop.f32.mrb[0].mxu0
        %v1049 = vpop.f32.mrb[0].mxu0
        %1050 = vdwg.mxu0
        %1051 = vrot.lane.b32.xlu0 %v720, 104
        %v1052 = vpop.permute.xlu0 %1051
        %1053 = vrot.lane.b32.xlu0 %v655, 104
        %v1054 = vpop.permute.xlu0 %1053
        %v1056 = vsel %vm721, %v1052, 0
        %v1059 = vsel %vm721, %v1054, 0
        %1061 = vmatprep.subr.bf16.mxu0 0
        %1062 = vmatpush1.bf16.xpose.msra.mxu0 %v1059
        %1063 = vmatprep.subr.bf16.mxu0 0
        %1064 = vmatpush1.bf16.xpose.msra.mxu0 0
        %1065 = vmatprep.subr.bf16.mxu0 0
        %1066 = vmatpush1.bf16.xpose.msra.mxu0 0
        %1067 = vmatprep.subr.bf16.mxu0 0
        %1068 = vmatpush1.bf16.xpose.msra.mxu0 0
        %1069 = vmatprep.subr.bf16.mxu0 0
        %1070 = vmatpush1.bf16.xpose.msra.mxu0 0
        %1071 = vmatprep.subr.bf16.mxu0 0
        %1072 = vmatpush1.bf16.xpose.msra.mxu0 0
        %1073 = vmatprep.subr.bf16.mxu0 0
        %1074 = vmatpush1.bf16.xpose.msra.mxu0 0
        %1075 = vmatprep.subr.bf16.mxu0 0
        %1076 = vmatpush1.bf16.xpose.msra.mxu0 0
        %1077 = vmatprep.subr.bf16.mxu0 0
        %1078 = vmatpush1.bf16.xpose.msra.mxu0 0
        %1079 = vmatprep.subr.bf16.mxu0 0
        %1080 = vmatpush1.bf16.xpose.msra.mxu0 0
        %1081 = vmatprep.subr.bf16.mxu0 0
        %1082 = vmatpush1.bf16.xpose.msra.mxu0 0
        %1083 = vmatprep.subr.bf16.mxu0 0
        %1084 = vmatpush1.bf16.xpose.msra.mxu0 0
        %1085 = vmatprep.subr.bf16.mxu0 0
        %1086 = vmatpush1.bf16.xpose.msra.mxu0 0
        %1087 = vmatprep.subr.bf16.mxu0 0
        %1088 = vmatpush1.bf16.xpose.msra.mxu0 0
        %1089 = vmatprep.subr.bf16.mxu0 0
        %1090 = vmatpush1.bf16.xpose.msra.mxu0 0
        %1091 = vmatprep.subr.bf16.mxu0 0
        %1092 = vmatpush1.bf16.xpose.msra.mxu0 0
        %1093 = vmatprep.mubr.bf16.mxu0 0
        %1094 = vmatmul.mubr.bf16.gmra.mrb[0].mxu0 %v1056
        %v1095 = vpop.f32.mrb[0].mxu0
        %v1096 = vadd.f32 0.0, %v1095
        %v1097 = vpop.f32.mrb[0].mxu0
        %v1098 = vpop.f32.mrb[0].mxu0
        %v1099 = vpop.f32.mrb[0].mxu0
        %1100 = vdwg.mxu0
        %v1101 = vsel %vm721, %v1096, -inf
        %1102 = vmax.xlane.f32.xlu0 %v1101
        %v1103 = vpop.xlane.xlu0 %1102
        %v1104 = vsub.f32 %v1096, %v1103
        %v1105 = vmul.f32 %v1104, 1.442695
        %v1106 = vpow.pop %v1105
        %v1107 = vsel %vm721, %v1106, 0.0
        %1108 = vadd.xlane.f32.xlu0 %v1107
        %v1109 = vpop.xlane.xlu0 %1108
        %v1110 = vrcp.pop %v1109
        %v1111 = vmul.f32 %v1106, %v1110
        %v1112 = vpack.c.bf16 %v1111, %v1111
        %1113 = vrot.lane.b32.xlu0 %v655, 72
        %v1114 = vpop.permute.xlu0 %1113
        %v1116 = vsel %vm721, %v1112, 0
        %v1119 = vsel %vm786, %v1114, 0
        %1121 = vmatprep.subr.bf16.mxu0 0
        %1122 = vmatpush1.bf16.msra.mxu0 %v1119
        %1123 = vmatprep.subr.bf16.mxu0 0
        %1124 = vmatpush1.bf16.msra.mxu0 0
        %1125 = vmatprep.subr.bf16.mxu0 0
        %1126 = vmatpush1.bf16.msra.mxu0 0
        %1127 = vmatprep.subr.bf16.mxu0 0
        %1128 = vmatpush1.bf16.msra.mxu0 0
        %1129 = vmatprep.subr.bf16.mxu0 0
        %1130 = vmatpush1.bf16.msra.mxu0 0
        %1131 = vmatprep.subr.bf16.mxu0 0
        %1132 = vmatpush1.bf16.msra.mxu0 0
        %1133 = vmatprep.subr.bf16.mxu0 0
        %1134 = vmatpush1.bf16.msra.mxu0 0
        %1135 = vmatprep.subr.bf16.mxu0 0
        %1136 = vmatpush1.bf16.msra.mxu0 0
        %1137 = vmatprep.subr.bf16.mxu0 0
        %1138 = vmatpush1.bf16.msra.mxu0 0
        %1139 = vmatprep.subr.bf16.mxu0 0
        %1140 = vmatpush1.bf16.msra.mxu0 0
        %1141 = vmatprep.subr.bf16.mxu0 0
        %1142 = vmatpush1.bf16.msra.mxu0 0
        %1143 = vmatprep.subr.bf16.mxu0 0
        %1144 = vmatpush1.bf16.msra.mxu0 0
        %1145 = vmatprep.subr.bf16.mxu0 0
        %1146 = vmatpush1.bf16.msra.mxu0 0
        %1147 = vmatprep.subr.bf16.mxu0 0
        %1148 = vmatpush1.bf16.msra.mxu0 0
        %1149 = vmatprep.subr.bf16.mxu0 0
        %1150 = vmatpush1.bf16.msra.mxu0 0
        %1151 = vmatprep.subr.bf16.mxu0 0
        %1152 = vmatpush1.bf16.msra.mxu0 0
        %1153 = vmatprep.mubr.bf16.mxu0 0
        %1154 = vmatmul.mubr.bf16.gmra.mrb[0].mxu0 %v1116
        %v1155 = vpop.f32.mrb[0].mxu0
        %v1156 = vadd.f32 0.0, %v1155
        %v1157 = vpop.f32.mrb[0].mxu0
        %v1158 = vpop.f32.mrb[0].mxu0
        %v1159 = vpop.f32.mrb[0].mxu0
        %1160 = vdwg.mxu0
        %1162 = vrot.lane.b32.xlu0 %v936, 8
        %v1163 = vpop.permute.xlu0 %1162
        %1166 = vrot.lane.b32.xlu0 %v1046, 16
        %v1167 = vpop.permute.xlu0 %1166
        %1170 = vrot.lane.b32.xlu0 %v1156, 24
        %v1171 = vpop.permute.xlu0 %1170
        %v1173 = vsel %vm721, %v825, %v1163
        %vm1174 = vcmask 130048
        %v1175 = vsel %vm1174, %v1173, %v1167
        %vm1176 = vcmask 195584
        %v1177 = vsel %vm1176, %v1175, %v1171
        %v1178 = vpack.c.bf16 %v1177, %v1177
        %v1179 = vld [vmem:[#allocation7] sm:$0xf]
        %v1180 = vld [vmem:[#allocation7 + $0x4] sm:$0xf]
        %v1181 = vld [vmem:[#allocation7 + $0x8] sm:$0xf]
        %v1182 = vld [vmem:[#allocation7 + $0xc] sm:$0xf]
        %v1183 = vld [vmem:[#allocation8] sm:$0x1]
        %v1185 = vlaneseq
        %v1186 = vshrl.u32 %v1185, 7
        %v1187 = vsub.s32 0, %v1186
        %v1188 = vrot.slane %v1183, %v1187
        %v1194 = vunpack.c.l.b16 %v1179
        %v1195 = vunpack.c.l.b16 %v1180
        %v1196 = vunpack.c.l.b16 %v1181
        %v1197 = vunpack.c.l.b16 %v1182
        %v1198 = vpack.c.b16 %v1195, %v1194
        %v1199 = vpack.c.b16 %v1197, %v1196
        %v1203 = vsel %vm559, %v1178, 0
        %1205 = vmatprep.subr.bf16.mxu0 0
        %1206 = vmatpush1.bf16.msra.mxu0 %v1198
        %1207 = vmatprep.subr.bf16.mxu0 0
        %1208 = vmatpush1.bf16.msra.mxu0 %v1199
        %1209 = vmatprep.subr.bf16.mxu0 0
        %1210 = vmatpush1.bf16.msra.mxu0 0
        %1211 = vmatprep.subr.bf16.mxu0 0
        %1212 = vmatpush1.bf16.msra.mxu0 0
        %1213 = vmatprep.subr.bf16.mxu0 0
        %1214 = vmatpush1.bf16.msra.mxu0 0
        %1215 = vmatprep.subr.bf16.mxu0 0
        %1216 = vmatpush1.bf16.msra.mxu0 0
        %1217 = vmatprep.subr.bf16.mxu0 0
        %1218 = vmatpush1.bf16.msra.mxu0 0
        %1219 = vmatprep.subr.bf16.mxu0 0
        %1220 = vmatpush1.bf16.msra.mxu0 0
        %1221 = vmatprep.subr.bf16.mxu0 0
        %1222 = vmatpush1.bf16.msra.mxu0 0
        %1223 = vmatprep.subr.bf16.mxu0 0
        %1224 = vmatpush1.bf16.msra.mxu0 0
        %1225 = vmatprep.subr.bf16.mxu0 0
        %1226 = vmatpush1.bf16.msra.mxu0 0
        %1227 = vmatprep.subr.bf16.mxu0 0
        %1228 = vmatpush1.bf16.msra.mxu0 0
        %1229 = vmatprep.subr.bf16.mxu0 0
        %1230 = vmatpush1.bf16.msra.mxu0 0
        %1231 = vmatprep.subr.bf16.mxu0 0
        %1232 = vmatpush1.bf16.msra.mxu0 0
        %1233 = vmatprep.subr.bf16.mxu0 0
        %1234 = vmatpush1.bf16.msra.mxu0 0
        %1235 = vmatprep.subr.bf16.mxu0 0
        %1236 = vmatpush1.bf16.msra.mxu0 0
        %1237 = vmatprep.mubr.bf16.mxu0 0
        %1238 = vmatmul.mubr.bf16.gmra.mrb[0].mxu0 %v1203
        %v1239 = vpop.f32.mrb[0].mxu0
        %v1240 = vadd.f32 %v1188, %v1239
        %v1241 = vpop.f32.mrb[0].mxu0
        %v1242 = vpop.f32.mrb[0].mxu0
        %v1243 = vpop.f32.mrb[0].mxu0
        %1244 = vdwg.mxu0
        %v1245 = vadd.f32 %v556, %v1240
        %v1246 = vld [vmem:[#allocation10] sm:$0x1]
        %v1247 = vld [vmem:[%s10] sm:$0x1]
        %v1248 = vsel %vm559, %v1245, 0.0
        %1249 = vadd.xlane.f32.xlu0 %v1248
        %v1250 = vpop.xlane.xlu0 %1249
        %v1251 = vmul.f32 %v1250, %v563
        %v1252 = vsub.f32 %v1245, %v1251
        %v1253 = vmul.f32 %v1252, %v1252
        %v1254 = vsel %vm559, %v1253, 0.0
        %1255 = vadd.xlane.f32.xlu0 %v1254
        %v1256 = vpop.xlane.xlu0 %1255
        %v1257 = vmul.f32 %v1256, %v563
        %v1258 = vadd.f32 %v1257, 1e-05
        %v1259 = vrsqrt.pop %v1258
        %v1260 = vmul.f32 %v1252, %v1259
        %v1262 = vlaneseq
        %v1263 = vshrl.u32 %v1262, 7
        %v1264 = vsub.s32 0, %v1263
        %v1265 = vrot.slane %v1246, %v1264
        %v1267 = vmul.f32 %v1260, %v1265
        %v1269 = vlaneseq
        %v1270 = vshrl.u32 %v1269, 7
        %v1271 = vsub.s32 0, %v1270
        %v1272 = vrot.slane %v1247, %v1271
        %v1274 = vadd.f32 %v1267, %v1272
        %v1275 = vpack.c.bf16 %v1274, %v1274
        %v1276 = vld [vmem:[%s11] sm:$0xf]
        %v1277 = vld [vmem:[%s11 + $0x4] sm:$0xf]
        %v1278 = vld [vmem:[%s11 + $0x8] sm:$0xf]
        %v1279 = vld [vmem:[%s11 + $0xc] sm:$0xf]
        %v1280 = vld [vmem:[%s12] sm:$0x1]
        %v1282 = vlaneseq
        %v1283 = vshrl.u32 %v1282, 7
        %v1284 = vsub.s32 0, %v1283
        %v1285 = vrot.slane %v1280, %v1284
        %v1291 = vunpack.c.l.b16 %v1276
        %v1292 = vunpack.c.l.b16 %v1277
        %v1293 = vunpack.c.l.b16 %v1278
        %v1294 = vunpack.c.l.b16 %v1279
        %v1295 = vpack.c.b16 %v1292, %v1291
        %v1296 = vpack.c.b16 %v1294, %v1293
        %v1300 = vsel %vm559, %v1275, 0
        %1302 = vmatprep.subr.bf16.mxu0 0
        %1303 = vmatpush1.bf16.msra.mxu0 %v1295
        %1304 = vmatprep.subr.bf16.mxu0 0
        %1305 = vmatpush1.bf16.msra.mxu0 %v1296
        %1306 = vmatprep.subr.bf16.mxu0 0
        %1307 = vmatpush1.bf16.msra.mxu0 0
        %1308 = vmatprep.subr.bf16.mxu0 0
        %1309 = vmatpush1.bf16.msra.mxu0 0
        %1310 = vmatprep.subr.bf16.mxu0 0
        %1311 = vmatpush1.bf16.msra.mxu0 0
        %1312 = vmatprep.subr.bf16.mxu0 0
        %1313 = vmatpush1.bf16.msra.mxu0 0
        %1314 = vmatprep.subr.bf16.mxu0 0
        %1315 = vmatpush1.bf16.msra.mxu0 0
        %1316 = vmatprep.subr.bf16.mxu0 0
        %1317 = vmatpush1.bf16.msra.mxu0 0
        %1318 = vmatprep.subr.bf16.mxu0 0
        %1319 = vmatpush1.bf16.msra.mxu0 0
        %1320 = vmatprep.subr.bf16.mxu0 0
        %1321 = vmatpush1.bf16.msra.mxu0 0
        %1322 = vmatprep.subr.bf16.mxu0 0
        %1323 = vmatpush1.bf16.msra.mxu0 0
        %1324 = vmatprep.subr.bf16.mxu0 0
        %1325 = vmatpush1.bf16.msra.mxu0 0
        %1326 = vmatprep.subr.bf16.mxu0 0
        %1327 = vmatpush1.bf16.msra.mxu0 0
        %1328 = vmatprep.subr.bf16.mxu0 0
        %1329 = vmatpush1.bf16.msra.mxu0 0
        %1330 = vmatprep.subr.bf16.mxu0 0
        %1331 = vmatpush1.bf16.msra.mxu0 0
        %1332 = vmatprep.subr.bf16.mxu0 0
        %1333 = vmatpush1.bf16.msra.mxu0 0
        %1334 = vmatprep.mubr.bf16.mxu0 0
        %1335 = vmatmul.mubr.bf16.gmra.mrb[0].mxu0 %v1300
        %v1336 = vpop.f32.mrb[0].mxu0
        %v1337 = vadd.f32 %v1285, %v1336
        %v1338 = vpop.f32.mrb[0].mxu0
        %v1339 = vpop.f32.mrb[0].mxu0
        %v1340 = vpop.f32.mrb[0].mxu0
        %1341 = vdwg.mxu0
        %v1342 = vmul.f32 %v1337, 0.5
        %v1343 = vmul.f32 %v1337, 0.044715
        %v1344 = vmul.f32 %v1343, %v1337
        %v1345 = vmul.f32 %v1344, %v1337
        %v1346 = vadd.f32 %v1337, %v1345
        %v1347 = vmul.f32 %v1346, 0.7978846
        %v1348 = vtanh.pop %v1347
        %v1349 = vadd.f32 %v1348, 1.0
        %v1350 = vmul.f32 %v1342, %v1349
        %v1351 = vpack.c.bf16 %v1350, %v1350
        %v1352 = vld [vmem:[%s13] sm:$0xf]
        %v1353 = vld [vmem:[%s13 + $0x4] sm:$0xf]
        %v1354 = vld [vmem:[%s13 + $0x8] sm:$0xf]
        %v1355 = vld [vmem:[%s13 + $0xc] sm:$0xf]
        %v1356 = vld [vmem:[%s13 + $0x10] sm:$0xf]
        %v1357 = vld [vmem:[%s13 + $0x14] sm:$0xf]
        %v1358 = vld [vmem:[%s13 + $0x18] sm:$0xf]
        %v1359 = vld [vmem:[%s13 + $0x1c] sm:$0xf]
        %v1360 = vld [vmem:[%s14] sm:$0x1]
        %v1362 = vlaneseq
        %v1363 = vshrl.u32 %v1362, 7
        %v1364 = vsub.s32 0, %v1363
        %v1365 = vrot.slane %v1360, %v1364
        %v1375 = vunpack.c.l.b16 %v1352
        %v1376 = vunpack.c.l.b16 %v1353
        %v1377 = vunpack.c.l.b16 %v1354
        %v1378 = vunpack.c.l.b16 %v1355
        %v1379 = vunpack.c.l.b16 %v1356
        %v1380 = vunpack.c.l.b16 %v1357
        %v1381 = vunpack.c.l.b16 %v1358
        %v1382 = vunpack.c.l.b16 %v1359
        %v1383 = vpack.c.b16 %v1376, %v1375
        %v1384 = vpack.c.b16 %v1378, %v1377
        %v1385 = vpack.c.b16 %v1380, %v1379
        %v1386 = vpack.c.b16 %v1382, %v1381
        %vm1391 = vcmask 523264
        %v1393 = vsel %vm1391, %v1351, 0
        %1395 = vmatprep.subr.bf16.mxu0 0
        %1396 = vmatpush1.bf16.msra.mxu0 %v1383
        %1397 = vmatprep.subr.bf16.mxu0 0
        %1398 = vmatpush1.bf16.msra.mxu0 %v1384
        %1399 = vmatprep.subr.bf16.mxu0 0
        %1400 = vmatpush1.bf16.msra.mxu0 %v1385
        %1401 = vmatprep.subr.bf16.mxu0 0
        %1402 = vmatpush1.bf16.msra.mxu0 %v1386
        %1403 = vmatprep.subr.bf16.mxu0 0
        %1404 = vmatpush1.bf16.msra.mxu0 0
        %1405 = vmatprep.subr.bf16.mxu0 0
        %1406 = vmatpush1.bf16.msra.mxu0 0
        %1407 = vmatprep.subr.bf16.mxu0 0
        %1408 = vmatpush1.bf16.msra.mxu0 0
        %1409 = vmatprep.subr.bf16.mxu0 0
        %1410 = vmatpush1.bf16.msra.mxu0 0
        %1411 = vmatprep.subr.bf16.mxu0 0
        %1412 = vmatpush1.bf16.msra.mxu0 0
        %1413 = vmatprep.subr.bf16.mxu0 0
        %1414 = vmatpush1.bf16.msra.mxu0 0
        %1415 = vmatprep.subr.bf16.mxu0 0
        %1416 = vmatpush1.bf16.msra.mxu0 0
        %1417 = vmatprep.subr.bf16.mxu0 0
        %1418 = vmatpush1.bf16.msra.mxu0 0
        %1419 = vmatprep.subr.bf16.mxu0 0
        %1420 = vmatpush1.bf16.msra.mxu0 0
        %1421 = vmatprep.subr.bf16.mxu0 0
        %1422 = vmatpush1.bf16.msra.mxu0 0
        %1423 = vmatprep.subr.bf16.mxu0 0
        %1424 = vmatpush1.bf16.msra.mxu0 0
        %1425 = vmatprep.subr.bf16.mxu0 0
        %1426 = vmatpush1.bf16.msra.mxu0 0
        %1427 = vmatprep.mubr.bf16.mxu0 0
        %1428 = vmatmul.mubr.bf16.gmra.mrb[0].mxu0 %v1393
        %v1429 = vpop.f32.mrb[0].mxu0
        %v1430 = vadd.f32 %v1365, %v1429
        %v1431 = vpop.f32.mrb[0].mxu0
        %v1432 = vpop.f32.mrb[0].mxu0
        %v1433 = vpop.f32.mrb[0].mxu0
        %1434 = vdwg.mxu0
        %v1435 = vadd.f32 %v1245, %v1430
        %1436 = vst.msk [vmem:[%s550] sm:$0xff] %vm559, %v1435
        %s1437 = sand.u32 %s360, 1
        %s1438 = scalar_lea.sflag [#allocation4], %s1437
        %s1439 = sand.u32 %s360, 1
        %s1440 = smul.addr %s1439, 8
        %s1441 = scalar_lea.vmem [#allocation11], %s1440
        // Predicated region
        $region101: #{tpu_custom_call.1} parent=79 // pred_check
          %p1442 = pneg %p370
        $region102: #{tpu_custom_call.1} parent=79 // pred_check_branch
          %1444 = sbr.rel (%p1442) target = $region104
        $region103: #{tpu_custom_call.1} parent=79 // pred_region
          %s1446 = ssub.s32 128, 128
          %1447 = vsyncadd %s1438, %s1446
          %s1448 = smul.addr %s32, 128
          %s1449 = scalar_lea.hbm %s15, %s1448
          %s1451 = sshll.u32 %s1441, 4
          %s1452 = int_to_ptr.vmem [resolvable:$true] %s1451
          %1454 = dma.vmem_to_hbm [thread:$0]  %s1452, 128, %s1449, %s1438
        $region104: #{tpu_custom_call.1} parent=79 // pred_fallthru
          _
      $region80: #{tpu_custom_call.1} parent=5 // pred_fallthru
        _
      %p1455 = scmp.le.s32.totalorder 2, %s27
      // Predicated region
      $region105: #{tpu_custom_call.1} parent=5 // pred_check
        %p1456 = pneg %p1455
      $region106: #{tpu_custom_call.1} parent=5 // pred_check_branch
        %1458 = sbr.rel (%p1456) target = $region108
      $region107: #{tpu_custom_call.1} parent=5 // pred_region
        %s1459 = ssub.s32 %s27, 2
        // Predicated region
        $region109: #{tpu_custom_call.1} parent=107 // pred_check
          %p1460 = pneg %p376
        $region110: #{tpu_custom_call.1} parent=107 // pred_check_branch
          %1462 = sbr.rel (%p1460) target = $region112
        $region111: #{tpu_custom_call.1} parent=107 // pred_region
          %s1463 = sand.u32 %s361, 1
          %s1464 = scalar_lea.sflag [#allocation4], %s1463
          %s1465 = sand.u32 %s361, 1
          %s1466 = smul.addr %s1465, 8
          %s1467 = scalar_lea.vmem [#allocation11], %s1466
          %1468 = dma.done %s1464, 128
        $region112: #{tpu_custom_call.1} parent=107 // pred_fallthru
          _
      $region108: #{tpu_custom_call.1} parent=5 // pred_fallthru
        _
    $region6: #{tpu_custom_call.1} parent=1 // loop_footer
      %s31 = sadd.s32 1, %s27
    $region7: #{tpu_custom_call.1} parent=1 // loop_footer_branch
      %26 = sbr.rel target = $region3
    $region8: #{tpu_custom_call.1} parent=1 // loop_exit
      _
    %1469 = vsyncpa [#allocation3], 1
    %s1470 = scalar_lea.sflag [#allocation3], 1
    %1471 = vsyncpa %s1470, 1
    %1472 = vsyncpa [#allocation6], 1
    %1473 = vsyncpa [#allocation9], 1
    %1474 = vsyncpa [#allocation4], 1
    %s1475 = scalar_lea.sflag [#allocation4], 1
    %1476 = vsyncpa %s1475, 1

</llo_original>
